<compile_context>
chip_gen: v7x
topology: tpu7x:2x2x1
jax: 0.10.0
libtpu: 0.0.40
codegen_flags: <defaults>
</compile_context>

<pallas_src>
import functools

import jax
import jax.numpy as jnp
from jax.experimental import pallas as pl
from jax.experimental.pallas import tpu as pltpu


# ----------------------------------------------------------------------------
# Kernels
# ----------------------------------------------------------------------------
def _reverse_kernel_direct(t_ref, y_ref, w_ref, b_ref, o_ref, *, mul):
    """f32-output path: accumulate the K reduction directly into o_ref.

    The output BlockSpec ignores k, so the (tm, tn) block stays resident in
    VMEM across the reduction axis — no separate accumulator needed.
    """
    k = pl.program_id(2)

    @pl.when(k == 0)
    def _init():
        o_ref[...] = jnp.zeros_like(o_ref)

    # MXU partial product: per-tile bf16 cast of y (free VPU op), f32 accum.
    o_ref[...] += jnp.dot(
        y_ref[...].astype(jnp.bfloat16), w_ref[...],
        preferred_element_type=jnp.float32)

    @pl.when(k == pl.num_programs(2) - 1)
    def _finalize():
        # Epilogue once per output tile: negating t is the "_ReverseFunc"
        # part; `mul` is the static reverse-time scale.
        neg_t = -t_ref[0]
        o_ref[...] = (mul * jnp.tanh(o_ref[...] + neg_t * b_ref[...])).astype(
            o_ref.dtype)


def _reverse_kernel_acc(t_ref, y_ref, w_ref, b_ref, o_ref, acc_ref, *, mul):
    """Non-f32 output path: f32 VMEM accumulator, cast on finalize."""
    k = pl.program_id(2)

    @pl.when(k == 0)
    def _init():
        acc_ref[...] = jnp.zeros_like(acc_ref)

    acc_ref[...] += jnp.dot(
        y_ref[...].astype(jnp.bfloat16), w_ref[...],
        preferred_element_type=jnp.float32)

    @pl.when(k == pl.num_programs(2) - 1)
    def _finalize():
        neg_t = -t_ref[0]
        z = acc_ref[...] + neg_t * b_ref[...]
        o_ref[...] = (mul * jnp.tanh(z)).astype(o_ref.dtype)


# ----------------------------------------------------------------------------
# Tile selection / VMEM budgeting
# ----------------------------------------------------------------------------
def _vmem_budget_bytes():
    """Per-generation scoped-VMEM budget (v7x: 64 MiB/TC, v5e/v6e: 128 MiB)."""
    try:
        cap = int(pltpu.get_tpu_info().vmem_capacity_bytes)
    except Exception:  # fall back to the most conservative generation (v7x)
        cap = 64 << 20
    cap = max(cap, 32 << 20)
    return min(int(cap * 0.72), 96 << 20)


def _tile_candidates(dim, base, max_tile=None):
    """Divisor candidates of `dim`, descending, full dim first."""
    cands = [dim] + [c for c in base if c < dim and dim % c == 0]
    seen, out = set(), []
    for c in cands:
        if c in seen:
            continue
        seen.add(c)
        if max_tile is None or c <= max_tile:
            out.append(c)
    if not out:  # max_tile filtered everything: keep the smallest divisor
        out = [cands[-1]]
    return out


def _tile_vmem_bytes(tm, tn, tk, y_itemsize, out_itemsize, needs_acc):
    y_buf = 2 * tm * tk * y_itemsize        # double-buffered y tile
    w_buf = 2 * tk * tn * 2                 # double-buffered bf16 W tile
    b_buf = 2 * 8 * tn * 4                  # (1, tn) f32 pads to 8 sublanes
    o_buf = 2 * tm * tn * out_itemsize      # double-buffered output tile
    acc = tm * tn * 4 if needs_acc else 0   # f32 accumulator scratch
    return y_buf + w_buf + b_buf + o_buf + acc


def _pick_tiles(B, D, y_itemsize, out_itemsize, needs_acc, budget,
                max_tm=None, max_tn=None, max_tk=None):
    headroom = 2 << 20  # compiler-internal scratch
    tm_cands = _tile_candidates(
        B, (2048, 1024, 512, 256, 128, 64, 32, 16, 8), max_tm)
    tn_cands = _tile_candidates(D, (4096, 2048, 1024, 512, 256, 128), max_tn)
    tk_cands = _tile_candidates(D, (4096, 2048, 1024, 512, 256, 128), max_tk)

    # Greedy, biggest-first.  Priority: tm (W is re-streamed B/tm times -> the
    # dominant HBM cost), then tn, then tk.
    for tm in tm_cands:
        for tn in tn_cands:
            for tk in tk_cands:
                if (_tile_vmem_bytes(tm, tn, tk, y_itemsize, out_itemsize,
                                     needs_acc) + headroom) <= budget:
                    return tm, tn, tk
    # Minimum tiles always fit on any generation.
    return tm_cands[-1], tn_cands[-1], tk_cands[-1]


# ----------------------------------------------------------------------------
# Public wrappers
# ----------------------------------------------------------------------------
def prepare_reverse_func_params(w, b):
    """One-time solver-setup: pre-cast W to bf16 and reshape b.

    Doing the W cast once here (instead of per evaluation in the wrapper)
    removes the f32-read + bf16-write HBM round trip on every vector-field
    evaluation — the ODE solver calls this kernel many times per step.
    """
    return w.astype(jnp.bfloat16), jnp.reshape(b.astype(jnp.float32), (1, -1))


def reverse_func(t, y, w, b, mul=1.0, out_dtype=None, *,
                 max_tm=None, max_tn=None, max_tk=None):
    """Computes mul * tanh(y @ W + (-t) * b) with a tiled Pallas kernel.

    `w`/`b` should come from prepare_reverse_func_params (bf16 W, (1, D) b).
    `mul` is baked in as a static Python float (matches the module, where mul
    is a constructor constant, typically -1.0 for reverse time).
    """
    B, D = y.shape
    if w.dtype != jnp.bfloat16:
        # Fallback only; callers should pre-cast once via
        # prepare_reverse_func_params to avoid per-call HBM cast traffic.
        w = w.astype(jnp.bfloat16)
    assert w.shape == (D, D), "W must be (hidden, hidden)"
    b2 = jnp.reshape(b.astype(jnp.float32), (1, D))
    t_arr = jnp.reshape(jnp.asarray(t, dtype=jnp.float32), (1,))

    out_dtype = jnp.dtype(out_dtype if out_dtype is not None else y.dtype)
    out_itemsize = out_dtype.itemsize
    y_itemsize = jnp.dtype(y.dtype).itemsize
    # f32 outputs accumulate directly into the resident output block.
    needs_acc = out_dtype != jnp.float32

    budget = _vmem_budget_bytes()
    tm, tn, tk = _pick_tiles(B, D, y_itemsize, out_itemsize, needs_acc, budget,
                             max_tm=max_tm, max_tn=max_tn, max_tk=max_tk)

    # Ensure >=2 blocks on the 'parallel' (i, j) axes so v7x's second
    # TensorCore isn't idle (one extra grid step; harmless on v5e/v6e).
    if (B // tm) * (D // tn) == 1 and D % 256 == 0:
        tn = D // 2

    grid = (B // tm, D // tn, D // tk)

    # Truthful HBM traffic for XLA's scheduler: W re-read B/tm times, y re-read
    # D/tn times, bias re-read per i block, output written once.
    bytes_accessed = ((B // tm) * D * D * 2
                      + (D // tn) * B * D * y_itemsize
                      + (B // tm) * D * 4
                      + B * D * out_itemsize)

    if needs_acc:
        kernel = functools.partial(_reverse_kernel_acc, mul=float(mul))
        scratch_shapes = [pltpu.VMEM((tm, tn), jnp.float32)]
    else:
        kernel = functools.partial(_reverse_kernel_direct, mul=float(mul))
        scratch_shapes = []

    return pl.pallas_call(
        kernel,
        out_shape=jax.ShapeDtypeStruct((B, D), out_dtype),
        grid=grid,
        in_specs=[
            pl.BlockSpec(memory_space=pltpu.MemorySpace.SMEM),   # t (scalar)
            pl.BlockSpec((tm, tk), lambda i, j, k: (i, k)),      # y tile
            pl.BlockSpec((tk, tn), lambda i, j, k: (k, j)),      # W tile (bf16)
            pl.BlockSpec((1, tn), lambda i, j, k: (0, j)),       # b tile
        ],
        out_specs=pl.BlockSpec((tm, tn), lambda i, j, k: (i, j)),
        scratch_shapes=scratch_shapes,
        compiler_params=pltpu.CompilerParams(
            dimension_semantics=("parallel", "parallel", "arbitrary"),
            vmem_limit_bytes=int(budget),
        ),
        cost_estimate=pl.CostEstimate(
            flops=2 * B * D * D,
            transcendentals=B * D,
            bytes_accessed=int(bytes_accessed),
        ),
    )(t_arr, y, w, b2)


def reverse_func_ref(t, y, w, b, mul=1.0):
    """Pure-JAX reference: mul * base_func(-t, y)."""
    z = jnp.dot(y, w, preferred_element_type=jnp.float32,
                precision=jax.lax.Precision.HIGHEST) + (-t) * b
    return mul * jnp.tanh(z)


# ----------------------------------------------------------------------------
# Demo / correctness checks
# ----------------------------------------------------------------------------
if __name__ == "__main__":
    B, D = 16, 1024
    mul = -1.0  # torchdiffeq uses mul=-1.0 when integrating backwards

    key = jax.random.PRNGKey(0)
    ky, kw, kb = jax.random.split(key, 3)
    y = jax.random.normal(ky, (B, D), dtype=jnp.float32)
    w = jax.random.normal(kw, (D, D), dtype=jnp.float32) * (1.0 / (D ** 0.5))
    b = jax.random.normal(kb, (D,), dtype=jnp.float32)
    t = jnp.asarray(0.7, dtype=jnp.float32)

    # One-time setup (solver init): W cast to bf16 once, reused every eval.
    w16, b2 = prepare_reverse_func_params(w, b)

    # References: tight (same bf16-rounded inputs as the kernel streams) and
    # loose (full f32 inputs; difference is only bf16 input rounding).
    y16f = y.astype(jnp.bfloat16).astype(jnp.float32)
    w16f = w16.astype(jnp.float32)
    ref_tight = reverse_func_ref(t, y16f, w16f, b, mul=mul)
    ref_full = reverse_func_ref(t, y, w, b, mul=mul)

    # 1) Default config: tm = B, big tn/tk -> W streamed from HBM exactly once,
    #    parallel j axis split so both v7x TensorCores get work.
    out = jax.block_until_ready(reverse_func(t, y, w16, b2, mul=mul))
    assert out.shape == (B, D) and out.dtype == y.dtype
    assert jnp.allclose(out, ref_tight, atol=1e-4, rtol=1e-4), \
        "mismatch vs bf16-input reference (default tiles)"
    assert jnp.allclose(out, ref_full, atol=5e-2, rtol=5e-2), \
        "mismatch vs f32 reference (default tiles)"

    # 2) Forced small tiles: exercises the multi-step K reduction with the
    #    init/finalize phases on the resident output block.
    out_k = jax.block_until_ready(
        reverse_func(t, y, w16, b2, mul=mul, max_tn=256, max_tk=256))
    assert jnp.allclose(out_k, ref_tight, atol=1e-4, rtol=1e-4), \
        "mismatch vs bf16-input reference (tiled K reduction)"

    # 3) bf16-output path (acc-scratch kernel) for solvers that accept it.
    out_bf16 = jax.block_until_ready(
        reverse_func(t, y, w16, b2, mul=mul, out_dtype=jnp.bfloat16))
    assert out_bf16.dtype == jnp.bfloat16
    assert jnp.allclose(out_bf16.astype(jnp.float32), ref_tight,
                        atol=2e-2, rtol=2e-2), \
        "mismatch vs bf16-input reference (bf16 output)"

    print("KERNEL_OK")
</pallas_src>

<mosaic_0001>
module attributes {stable_mosaic.version = 11 : i64} {
  func.func @_reverse_kernel_direct(%arg0: i32, %arg1: i32, %arg2: i32, %arg3: memref<1xf32, #tpu.memory_space<smem>>, %arg4: memref<16x1024xf32, #tpu.memory_space<vmem>>, %arg5: memref<1024x512xbf16, #tpu.memory_space<vmem>>, %arg6: memref<1x512xf32, #tpu.memory_space<vmem>>, %arg7: memref<16x512xf32, #tpu.memory_space<vmem>>) attributes {dimension_semantics = [#tpu.dimension_semantics<parallel>, #tpu.dimension_semantics<parallel>, #tpu.dimension_semantics<arbitrary>], iteration_bounds = array<i64: 1, 2, 1>, scalar_prefetch = 0 : i64, scratch_operands = 0 : i64, tpu.core_type = #tpu.core_type<tc>, window_params = [{transform_indices = @transform_0, window_bounds = array<i64: 1>}, {transform_indices = @transform_1, window_bounds = array<i64: 16, 1024>}, {transform_indices = @transform_2, window_bounds = array<i64: 1024, 512>}, {transform_indices = @transform_3, window_bounds = array<i64: 1, 512>}, {transform_indices = @transform_4, window_bounds = array<i64: 16, 512>}]} {
    %c0_i32 = arith.constant 0 : i32
    %0 = arith.cmpi eq, %arg2, %c0_i32 : i32
    %1 = arith.extui %0 : i1 to i32
    %c0_i32_0 = arith.constant 0 : i32
    %2 = arith.cmpi ne, %1, %c0_i32_0 : i32
    scf.if %2 {
      %cst_10 = arith.constant 0.000000e+00 : f32
      %13 = vector.broadcast %cst_10 : f32 to vector<16x512xf32>
      %c0_11 = arith.constant 0 : index
      %c0_12 = arith.constant 0 : index
      %14 = vector.load %arg7[%c0_11, %c0_12] : memref<16x512xf32, #tpu.memory_space<vmem>>, vector<16x512xf32>
      tpu.vector_store %arg7[%c0_11, %c0_12], %13 {strides = array<i32>} : memref<16x512xf32, #tpu.memory_space<vmem>>, vector<16x512xf32>,
    } else {
    }
    %c0 = arith.constant 0 : index
    %c0_1 = arith.constant 0 : index
    %3 = vector.load %arg7[%c0, %c0_1] : memref<16x512xf32, #tpu.memory_space<vmem>>, vector<16x512xf32>
    %c0_2 = arith.constant 0 : index
    %c0_3 = arith.constant 0 : index
    %4 = vector.load %arg4[%c0_2, %c0_3] : memref<16x1024xf32, #tpu.memory_space<vmem>>, vector<16x1024xf32>
    %5 = arith.truncf %4 : vector<16x1024xf32> to vector<16x1024xbf16>
    %c0_4 = arith.constant 0 : index
    %c0_5 = arith.constant 0 : index
    %6 = vector.load %arg5[%c0_4, %c0_5] : memref<1024x512xbf16, #tpu.memory_space<vmem>>, vector<1024x512xbf16>
    %cst = arith.constant dense<0.000000e+00> : vector<16x512xf32>
    %7 = tpu.matmul %5, %6, %cst {dimension_numbers = #tpu.dot_dimension_numbers<[1], [0], [0], [1], [0, 0, 1, 1], [], []>} : vector<16x1024xbf16>, vector<1024x512xbf16>, vector<16x512xf32> -> vector<16x512xf32>
    %8 = arith.addf %3, %7 : vector<16x512xf32>
    %c0_6 = arith.constant 0 : index
    %c0_7 = arith.constant 0 : index
    %9 = vector.load %arg7[%c0_6, %c0_7] : memref<16x512xf32, #tpu.memory_space<vmem>>, vector<16x512xf32>
    tpu.vector_store %arg7[%c0_6, %c0_7], %8 {strides = array<i32>} : memref<16x512xf32, #tpu.memory_space<vmem>>, vector<16x512xf32>,
    %c0_i32_8 = arith.constant 0 : i32
    %10 = arith.cmpi eq, %arg2, %c0_i32_8 : i32
    %11 = arith.extui %10 : i1 to i32
    %c0_i32_9 = arith.constant 0 : i32
    %12 = arith.cmpi ne, %11, %c0_i32_9 : i32
    scf.if %12 {
      %c0_10 = arith.constant 0 : index
      %13 = memref.load %arg3[%c0_10] : memref<1xf32, #tpu.memory_space<smem>>
      %cst_11 = arith.constant 0.000000e+00 : f32
      %14 = arith.subf %cst_11, %13 : f32
      %c0_12 = arith.constant 0 : index
      %c0_13 = arith.constant 0 : index
      %15 = vector.load %arg7[%c0_12, %c0_13] : memref<16x512xf32, #tpu.memory_space<vmem>>, vector<16x512xf32>
      %c0_14 = arith.constant 0 : index
      %c0_15 = arith.constant 0 : index
      %16 = vector.load %arg6[%c0_14, %c0_15] : memref<1x512xf32, #tpu.memory_space<vmem>>, vector<1x512xf32>
      %17 = vector.broadcast %14 : f32 to vector<1x512xf32>
      %18 = arith.mulf %17, %16 : vector<1x512xf32>
      %19 = vector.broadcast %18 : vector<1x512xf32> to vector<16x512xf32>
      %20 = arith.addf %15, %19 : vector<16x512xf32>
      %21 = math.tanh %20 : vector<16x512xf32>
      %cst_16 = arith.constant -1.000000e+00 : f32
      %22 = vector.broadcast %cst_16 : f32 to vector<16x512xf32>
      %23 = arith.mulf %22, %21 : vector<16x512xf32>
      %c0_17 = arith.constant 0 : index
      %c0_18 = arith.constant 0 : index
      %24 = vector.load %arg7[%c0_17, %c0_18] : memref<16x512xf32, #tpu.memory_space<vmem>>, vector<16x512xf32>
      tpu.vector_store %arg7[%c0_17, %c0_18], %23 {strides = array<i32>} : memref<16x512xf32, #tpu.memory_space<vmem>>, vector<16x512xf32>,
    } else {
    }
    return
  }
  func.func @transform_0(%arg0: i32, %arg1: i32, %arg2: i32) -> i32 {
    %c0_i32 = arith.constant 0 : i32
    %c0_i32_0 = arith.constant 0 : i32
    return %c0_i32 : i32
  }
  func.func @transform_1(%arg0: i32, %arg1: i32, %arg2: i32) -> (i32, i32) {
    %c0_i32 = arith.constant 0 : i32
    return %arg0, %arg2 : i32, i32
  }
  func.func @transform_2(%arg0: i32, %arg1: i32, %arg2: i32) -> (i32, i32) {
    %c0_i32 = arith.constant 0 : i32
    return %arg2, %arg1 : i32, i32
  }
  func.func @transform_3(%arg0: i32, %arg1: i32, %arg2: i32) -> (i32, i32) {
    %c0_i32 = arith.constant 0 : i32
    %c0_i32_0 = arith.constant 0 : i32
    return %c0_i32, %arg1 : i32, i32
  }
  func.func @transform_4(%arg0: i32, %arg1: i32, %arg2: i32) -> (i32, i32) {
    %c0_i32 = arith.constant 0 : i32
    return %arg0, %arg1 : i32, i32
  }
}

</mosaic_0001>

<llo_original>
// kernel: tpu_custom_call.1
$region0: #{tpu_custom_call.1}
  #allocation0 [shape = 'u32[]', space=smem, size = 0x4, offset = 0x4, fixed_abs, tag = 'smem constant byte address 0x4 - core index']
  #allocation1 [shape = 'u32[144,128]{1,0:T(1,128)}', space=vmem, size = 0x12000, scoped, tag = 'internal scratch']
  #allocation2 [shape = 'f32[1]{0:T(128)S(6)}', space=smem, size = 0x200, scoped, tag = 'scoped memory for tpu_custom_call.1']
  %s0 = inlined_call_operand.<no memory space> [shape: f32[1], index: 0, kind: input, shape index: {}]
  %s1 = inlined_call_operand.hbm [shape: f32[16,1024], index: 1, kind: input, shape index: {}]
  %s2 = inlined_call_operand.hbm [shape: bf16[1024,1024], index: 2, kind: input, shape index: {}]
  %s3 = inlined_call_operand.hbm [shape: f32[1,1024], index: 3, kind: input, shape index: {}]
  %s4 = inlined_call_operand.hbm [shape: f32[16,1024], index: 4, kind: output, shape index: {}]
  %s5 = sld [smem:[#allocation0]]
  $region69: #{tpu_custom_call.1} parent=0
    _
  %s7 = ssub.s32 1, %s5
  %s8 = scalar_select 0, %s7, %s5
  %9 = sst [smem:[#allocation2]] %s0
  $region1: #{tpu_custom_call.1} parent=0
    #allocation3 [shape = 'u8[65536]{0}', space=vmem, size = 0x10000, scoped, tag = 'input window, operand 1, single buffered']
    #allocation4 [shape = 's32[2]{0}', space=sflag, size = 0x8, scoped, tag = 'scoped memory for tpu_custom_call.1']
    #allocation5 [shape = 's32[2]{0}', space=sflag, size = 0x8, scoped, tag = 'scoped memory for tpu_custom_call.1']
    #allocation6 [shape = 'u8[2097152]{0}', space=vmem, size = 0x200000, scoped, tag = 'input window, operand 2']
    #allocation7 [shape = 's32[2]{0}', space=sflag, size = 0x8, scoped, tag = 'scoped memory for tpu_custom_call.1']
    #allocation8 [shape = 'u8[4096]{0}', space=vmem, size = 0x1000, scoped, tag = 'input window, operand 3']
    #allocation9 [shape = 'u8[65536]{0}', space=vmem, size = 0x10000, scoped, tag = 'output window, operand 0']
    %10 = vsyncpa [#allocation4], 0
    %11 = vsyncpa [#allocation7], 0
    %s12 = scalar_lea.sflag [#allocation7], 1
    %13 = vsyncpa %s12, 0
    %14 = vsyncpa [#allocation5], 0
    %s15 = scalar_lea.sflag [#allocation5], 1
    %16 = vsyncpa %s15, 0
    loop: start=0, step=1, limit=4
    $region2: #{tpu_custom_call.1} parent=1 // loop_pre_header
      _
    $region3: #{tpu_custom_call.1} parent=1 // loop_header
      %s18 = sphi 0, %s22
      %p19 = scmp.ge.s32.totalorder %s18, 4
      %s25 = sphi 0, %s44
      %s26 = sphi 0, %s40
      %s27 = sphi 0, %s36
      %s28 = sphi 0, %s25
      %s29 = sphi 0, %s26
      %s30 = sphi 0, %s27
      %s31 = sphi 0, %s28
      %s32 = sphi 0, %s29
      %s33 = sphi 0, %s30
      %s45 = sphi 0, %s45
      %s47 = sphi 0, %s45
      %s48 = sphi 0, %s47
      %s62 = sphi 0, %s48
      %s70 = sphi 0, %s72
      %s73 = sphi 0, %s70
      %s74 = sphi 0, %s73
      %s90 = sphi 0, %s74
      %s98 = sphi 0, %s100
      %s101 = sphi 0, %s98
      %s102 = sphi 0, %s101
      %s118 = sphi 0, %s102
      %s124 = sphi 0, %s126
      %s127 = sphi 0, %s124
      %s128 = sphi 0, %s127
      %s144 = sphi 0, %s128
      %s152 = sphi 0, %s154
      %s155 = sphi 0, %s152
      %s156 = sphi 0, %s155
      %s172 = sphi 0, %s156
    $region4: #{tpu_custom_call.1} parent=1 // loop_header_branch
      %21 = sbr.rel (%p19) target = $region8
    $region5: #{tpu_custom_call.1} parent=1 // loop_body
      %s23 = ssub.s32 %s18, 1
      %s24 = ssub.s32 %s18, 2
      %s34 = sadd.s32 1, %s27
      %p35 = scmp.ge.s32.totalorder %s34, 1
      %s36 = scalar_select %p35, 0, %s34
      %s37 = sadd.s32 1, %s26
      %s38 = scalar_select %p35, %s37, %s26
      %p39 = scmp.ge.s32.totalorder %s38, 2
      %s40 = scalar_select %p39, 0, %s38
      %s41 = sadd.s32 1, %s25
      %s42 = scalar_select %p39, %s41, %s25
      %p43 = scmp.ge.s32.totalorder %s42, 1
      %s44 = scalar_select %p43, 0, %s42
      %s46 = sadd.s32 %s45, 1
      %p49 = scmp.eq.s32.totalorder %s18, 1
      %p50 = scmp.ne.s32.totalorder %s45, %s47
      %p51 = scmp.eq.s32.totalorder %s18, 0
      %p52 = por %p50, %p51
      %p53 = scmp.ne.s32.totalorder %s45, %s47
      %p54 = scmp.eq.s32.totalorder %s23, 1
      %p55 = por %p53, %p54
      %p56 = scmp.ne.s32.totalorder %s47, %s48
      %p57 = scmp.eq.s32.totalorder %s23, 0
      %p58 = por %p56, %p57
      %p59 = scmp.ne.s32.totalorder %s47, %s48
      %p60 = scmp.eq.s32.totalorder %s24, 1
      %p61 = por %p59, %p60
      %p63 = scmp.ne.s32.totalorder %s48, %s62
      %p64 = scmp.eq.s32.totalorder %s24, 0
      %p65 = por %p63, %p64
      %s66 = ssub.s32 %s25, %s44
      %s67 = ssub.s32 %s27, %s36
      %s68 = sor.u32 %s66, %s67
      %p69 = scmp.eq.s32.totalorder %s68, 0
      %s71 = sadd.s32 %s70, 1
      %s72 = scalar_select %p69, %s70, %s71
      %p75 = pneg %p69
      %p76 = scmp.eq.s32.totalorder %s18, 1
      %p77 = por %p75, %p76
      %p78 = scmp.ne.s32.totalorder %s70, %s73
      %p79 = scmp.eq.s32.totalorder %s18, 0
      %p80 = por %p78, %p79
      %p81 = scmp.ne.s32.totalorder %s70, %s73
      %p82 = scmp.eq.s32.totalorder %s23, 1
      %p83 = por %p81, %p82
      %p84 = scmp.ne.s32.totalorder %s73, %s74
      %p85 = scmp.eq.s32.totalorder %s23, 0
      %p86 = por %p84, %p85
      %p87 = scmp.ne.s32.totalorder %s73, %s74
      %p88 = scmp.eq.s32.totalorder %s24, 1
      %p89 = por %p87, %p88
      %p91 = scmp.ne.s32.totalorder %s74, %s90
      %p92 = scmp.eq.s32.totalorder %s24, 0
      %p93 = por %p91, %p92
      %s94 = ssub.s32 %s27, %s36
      %s95 = ssub.s32 %s26, %s40
      %s96 = sor.u32 %s94, %s95
      %p97 = scmp.eq.s32.totalorder %s96, 0
      %s99 = sadd.s32 %s98, 1
      %s100 = scalar_select %p97, %s98, %s99
      %p103 = pneg %p97
      %p104 = scmp.eq.s32.totalorder %s18, 1
      %p105 = por %p103, %p104
      %p106 = scmp.ne.s32.totalorder %s98, %s101
      %p107 = scmp.eq.s32.totalorder %s18, 0
      %p108 = por %p106, %p107
      %p109 = scmp.ne.s32.totalorder %s98, %s101
      %p110 = scmp.eq.s32.totalorder %s23, 1
      %p111 = por %p109, %p110
      %p112 = scmp.ne.s32.totalorder %s101, %s102
      %p113 = scmp.eq.s32.totalorder %s23, 0
      %p114 = por %p112, %p113
      %p115 = scmp.ne.s32.totalorder %s101, %s102
      %p116 = scmp.eq.s32.totalorder %s24, 1
      %p117 = por %p115, %p116
      %p119 = scmp.ne.s32.totalorder %s102, %s118
      %p120 = scmp.eq.s32.totalorder %s24, 0
      %p121 = por %p119, %p120
      %s122 = ssub.s32 %s26, %s40
      %p123 = scmp.eq.s32.totalorder %s122, 0
      %s125 = sadd.s32 %s124, 1
      %s126 = scalar_select %p123, %s124, %s125
      %p129 = pneg %p123
      %p130 = scmp.eq.s32.totalorder %s18, 1
      %p131 = por %p129, %p130
      %p132 = scmp.ne.s32.totalorder %s124, %s127
      %p133 = scmp.eq.s32.totalorder %s18, 0
      %p134 = por %p132, %p133
      %p135 = scmp.ne.s32.totalorder %s124, %s127
      %p136 = scmp.eq.s32.totalorder %s23, 1
      %p137 = por %p135, %p136
      %p138 = scmp.ne.s32.totalorder %s127, %s128
      %p139 = scmp.eq.s32.totalorder %s23, 0
      %p140 = por %p138, %p139
      %p141 = scmp.ne.s32.totalorder %s127, %s128
      %p142 = scmp.eq.s32.totalorder %s24, 1
      %p143 = por %p141, %p142
      %p145 = scmp.ne.s32.totalorder %s128, %s144
      %p146 = scmp.eq.s32.totalorder %s24, 0
      %p147 = por %p145, %p146
      %s148 = ssub.s32 %s25, %s44
      %s149 = ssub.s32 %s26, %s40
      %s150 = sor.u32 %s148, %s149
      %p151 = scmp.eq.s32.totalorder %s150, 0
      %s153 = sadd.s32 %s152, 1
      %s154 = scalar_select %p151, %s152, %s153
      %p157 = pneg %p151
      %p158 = scmp.eq.s32.totalorder %s18, 1
      %p159 = por %p157, %p158
      %p160 = scmp.ne.s32.totalorder %s152, %s155
      %p161 = scmp.eq.s32.totalorder %s18, 0
      %p162 = por %p160, %p161
      %p163 = scmp.ne.s32.totalorder %s152, %s155
      %p164 = scmp.eq.s32.totalorder %s23, 1
      %p165 = por %p163, %p164
      %p166 = scmp.ne.s32.totalorder %s155, %s156
      %p167 = scmp.eq.s32.totalorder %s23, 0
      %p168 = por %p166, %p167
      %p169 = scmp.ne.s32.totalorder %s155, %s156
      %p170 = scmp.eq.s32.totalorder %s24, 1
      %p171 = por %p169, %p170
      %p173 = scmp.ne.s32.totalorder %s156, %s172
      %p174 = scmp.eq.s32.totalorder %s24, 0
      %p175 = por %p173, %p174
      %p176 = scmp.le.s32.totalorder 1, %s18
      %p177 = scmp.lt.s32.totalorder %s18, 3
      %p178 = pnand %p176, %p177
      %p179 = pneg %p178
      // Predicated region
      $region9: #{tpu_custom_call.1} parent=5 // pred_check
        _
      $region10: #{tpu_custom_call.1} parent=5 // pred_check_branch
        %181 = sbr.rel (%p178) target = $region12
      $region11: #{tpu_custom_call.1} parent=5 // pred_region
        %s182 = ssub.s32 %s18, 1
        // Predicated region
        $region13: #{tpu_custom_call.1} parent=11 // pred_check
          %p183 = pneg %p58
        $region14: #{tpu_custom_call.1} parent=11 // pred_check_branch
          %185 = sbr.rel (%p183) target = $region16
        $region15: #{tpu_custom_call.1} parent=11 // pred_region
          _
        $region16: #{tpu_custom_call.1} parent=11 // pred_fallthru
          _
        // Predicated region
        $region17: #{tpu_custom_call.1} parent=11 // pred_check
          %p186 = pneg %p86
        $region18: #{tpu_custom_call.1} parent=11 // pred_check_branch
          %188 = sbr.rel (%p186) target = $region20
        $region19: #{tpu_custom_call.1} parent=11 // pred_region
          %s189 = smul.u32 2, %s28
          %s190 = smul.u32 8, %s30
          %s192 = ssub.s32 2048, 2048
          %193 = vsyncadd [#allocation4], %s192
          %s194 = smul.addr %s189, 8
          %s195 = sadd.s32 %s190, %s194
          %s196 = smul.addr %s195, 128
          %s197 = scalar_lea.hbm %s1, %s196
          %s198 = sshll.u32 [#allocation3], 4
          %s199 = int_to_ptr.vmem [resolvable:$true] %s198
          %204 = dma.hbm_to_vmem [thread:$0]  %s197, 2048, %s199, [#allocation4], 1024, 1024, 64
        $region20: #{tpu_custom_call.1} parent=11 // pred_fallthru
          _
      $region12: #{tpu_custom_call.1} parent=5 // pred_fallthru
        _
      %p205 = scmp.lt.s32.totalorder %s18, 2
      // Predicated region
      $region21: #{tpu_custom_call.1} parent=5 // pred_check
        %p206 = pneg %p205
      $region22: #{tpu_custom_call.1} parent=5 // pred_check_branch
        %208 = sbr.rel (%p206) target = $region24
      $region23: #{tpu_custom_call.1} parent=5 // pred_region
        // Predicated region
        $region25: #{tpu_custom_call.1} parent=23 // pred_check
          %p209 = pneg %p108
        $region26: #{tpu_custom_call.1} parent=23 // pred_check_branch
          %211 = sbr.rel (%p209) target = $region28
        $region27: #{tpu_custom_call.1} parent=23 // pred_region
          %s212 = sand.u32 %s18, 1
          %s213 = scalar_lea.sflag [#allocation7], %s212
          %s214 = sand.u32 %s98, 1
          %s215 = smul.addr %s214, 2048
          %s216 = scalar_lea.vmem [#allocation6], %s215
          %s217 = smul.u32 128, %s27
          %s218 = smul.u32 4, %s26
          %s220 = ssub.s32 32768, 32768
          %221 = vsyncadd %s213, %s220
          %s222 = smul.addr %s217, 8
          %s223 = sadd.s32 %s218, %s222
          %s224 = smul.addr %s223, 64
          %s225 = scalar_lea.hbm %s2, %s224
          %s226 = sshll.u32 %s216, 4
          %s227 = int_to_ptr.vmem [resolvable:$true] %s226
          %232 = dma.hbm_to_vmem [thread:$0]  %s225, 32768, %s227, %s213, 512, 256, 16
        $region28: #{tpu_custom_call.1} parent=23 // pred_fallthru
          _
        // Predicated region
        $region29: #{tpu_custom_call.1} parent=23 // pred_check
          %p233 = pneg %p134
        $region30: #{tpu_custom_call.1} parent=23 // pred_check_branch
          %235 = sbr.rel (%p233) target = $region32
        $region31: #{tpu_custom_call.1} parent=23 // pred_region
          %s236 = sand.u32 %s18, 1
          %s237 = scalar_lea.sflag [#allocation7], %s236
          %s238 = sand.u32 %s124, 1
          %s239 = smul.addr %s238, 4
          %s240 = scalar_lea.vmem [#allocation8], %s239
          %s241 = smul.u32 4, %s26
          %s243 = ssub.s32 64, 64
          %244 = vsyncadd %s237, %s243
          %s245 = smul.addr %s241, 16
          %s246 = scalar_lea.hbm %s3, %s245
          %s248 = sshll.u32 %s240, 4
          %s249 = int_to_ptr.vmem [resolvable:$true] %s248
          %251 = dma.hbm_to_vmem [thread:$0]  %s246, 64, %s249, %s237
        $region32: #{tpu_custom_call.1} parent=23 // pred_fallthru
          _
      $region24: #{tpu_custom_call.1} parent=5 // pred_fallthru
        _
      %p252 = scmp.le.s32.totalorder 1, %s18
      %p253 = scmp.lt.s32.totalorder %s18, 3
      %p254 = pnand %p252, %p253
      %p255 = pneg %p254
      // Predicated region
      $region33: #{tpu_custom_call.1} parent=5 // pred_check
        _
      $region34: #{tpu_custom_call.1} parent=5 // pred_check_branch
        %257 = sbr.rel (%p254) target = $region36
      $region35: #{tpu_custom_call.1} parent=5 // pred_region
        %s258 = ssub.s32 %s18, 1
        // Predicated region
        $region37: #{tpu_custom_call.1} parent=35 // pred_check
          %p259 = pneg %p86
        $region38: #{tpu_custom_call.1} parent=35 // pred_check_branch
          %261 = sbr.rel (%p259) target = $region40
        $region39: #{tpu_custom_call.1} parent=35 // pred_region
          %262 = dma.done [#allocation4], 2048
        $region40: #{tpu_custom_call.1} parent=35 // pred_fallthru
          _
        %s263 = sand.u32 %s23, 1
        %s264 = scalar_lea.sflag [#allocation7], %s263
        %s265 = sand.u32 %s101, 1
        %s266 = smul.addr %s265, 2048
        %s267 = scalar_lea.vmem [#allocation6], %s266
        // Predicated region
        $region41: #{tpu_custom_call.1} parent=35 // pred_check
          %p268 = pneg %p114
        $region42: #{tpu_custom_call.1} parent=35 // pred_check_branch
          %270 = sbr.rel (%p268) target = $region44
        $region43: #{tpu_custom_call.1} parent=35 // pred_region
          %271 = dma.done %s264, 32768
        $region44: #{tpu_custom_call.1} parent=35 // pred_fallthru
          _
        %s272 = sand.u32 %s23, 1
        %s273 = scalar_lea.sflag [#allocation7], %s272
        %s274 = sand.u32 %s127, 1
        %s275 = smul.addr %s274, 4
        %s276 = scalar_lea.vmem [#allocation8], %s275
        // Predicated region
        $region45: #{tpu_custom_call.1} parent=35 // pred_check
          %p277 = pneg %p140
        $region46: #{tpu_custom_call.1} parent=35 // pred_check_branch
          %279 = sbr.rel (%p277) target = $region48
        $region47: #{tpu_custom_call.1} parent=35 // pred_region
          %280 = dma.done %s273, 64
        $region48: #{tpu_custom_call.1} parent=35 // pred_fallthru
          _
        %p281 = pneg %p58
        %p282 = pneg %p55
        %p283 = pneg %p86
        %p284 = pneg %p83
        %s285 = sand.u32 %s23, 1
        %s286 = scalar_lea.sflag [#allocation7], %s285
        %s287 = sand.u32 %s101, 1
        %s288 = smul.addr %s287, 2048
        %s289 = scalar_lea.vmem [#allocation6], %s288
        %p290 = pneg %p114
        %p291 = pneg %p111
        %s292 = sand.u32 %s23, 1
        %s293 = scalar_lea.sflag [#allocation7], %s292
        %s294 = sand.u32 %s127, 1
        %s295 = smul.addr %s294, 4
        %s296 = scalar_lea.vmem [#allocation8], %s295
        %p297 = pneg %p140
        %p298 = pneg %p137
        %p299 = pneg %p168
        %p300 = pneg %p165
        %s301 = sand.u32 %s155, 1
        %s302 = scalar_lea.sflag [#allocation5], %s301
        %s303 = sand.u32 %s155, 1
        %s304 = smul.addr %s303, 64
        %s305 = scalar_lea.vmem [#allocation9], %s304
        %s306 = smul.u32 2, %s28
        %s307 = smul.u32 8, %s30
        %s308 = smul.u32 128, %s30
        %s309 = smul.u32 4, %s29
        %s310 = smul.u32 4, %s29
        %s311 = smul.u32 2, %s28
        %s312 = smul.u32 4, %s29
        %p313 = scmp.eq.s32.totalorder %s30, 0
        // Predicated region
        $region49: #{tpu_custom_call.1} parent=35 // pred_check
          %p314 = pneg %p313
        $region50: #{tpu_custom_call.1} parent=35 // pred_check_branch
          %316 = sbr.rel (%p314) target = $region52
        $region51: #{tpu_custom_call.1} parent=35 // pred_region
          %317 = vst [vmem:[%s305] sm:$0xff] 0.0
          %318 = vst [vmem:[%s305 + $0x8] sm:$0xff] 0.0
          %319 = vst [vmem:[%s305 + $0x10] sm:$0xff] 0.0
          %320 = vst [vmem:[%s305 + $0x18] sm:$0xff] 0.0
          %321 = vst [vmem:[%s305 + $0x20] sm:$0xff] 0.0
          %322 = vst [vmem:[%s305 + $0x28] sm:$0xff] 0.0
          %323 = vst [vmem:[%s305 + $0x30] sm:$0xff] 0.0
          %324 = vst [vmem:[%s305 + $0x38] sm:$0xff] 0.0
        $region52: #{tpu_custom_call.1} parent=35 // pred_fallthru
          _
        %v325 = vld [vmem:[%s305] sm:$0xff]
        %v326 = vld [vmem:[%s305 + $0x8] sm:$0xff]
        %v327 = vld [vmem:[%s305 + $0x10] sm:$0xff]
        %v328 = vld [vmem:[%s305 + $0x18] sm:$0xff]
        %v329 = vld [vmem:[%s305 + $0x20] sm:$0xff]
        %v330 = vld [vmem:[%s305 + $0x28] sm:$0xff]
        %v331 = vld [vmem:[%s305 + $0x30] sm:$0xff]
        %v332 = vld [vmem:[%s305 + $0x38] sm:$0xff]
        %v333 = vld [vmem:[#allocation3] sm:$0xff]
        %v334 = vld [vmem:[#allocation3 + $0x8] sm:$0xff]
        %v335 = vld [vmem:[#allocation3 + $0x10] sm:$0xff]
        %v336 = vld [vmem:[#allocation3 + $0x18] sm:$0xff]
        %v337 = vld [vmem:[#allocation3 + $0x20] sm:$0xff]
        %v338 = vld [vmem:[#allocation3 + $0x28] sm:$0xff]
        %v339 = vld [vmem:[#allocation3 + $0x30] sm:$0xff]
        %v340 = vld [vmem:[#allocation3 + $0x38] sm:$0xff]
        %v341 = vld [vmem:[#allocation3 + $0x40] sm:$0xff]
        %v342 = vld [vmem:[#allocation3 + $0x48] sm:$0xff]
        %v343 = vld [vmem:[#allocation3 + $0x50] sm:$0xff]
        %v344 = vld [vmem:[#allocation3 + $0x58] sm:$0xff]
        %v345 = vld [vmem:[#allocation3 + $0x60] sm:$0xff]
        %v346 = vld [vmem:[#allocation3 + $0x68] sm:$0xff]
        %v347 = vld [vmem:[#allocation3 + $0x70] sm:$0xff]
        %v348 = vld [vmem:[#allocation3 + $0x78] sm:$0xff]
        %v349 = vpack.c.bf16 %v341, %v333
        %v350 = vpack.c.bf16 %v342, %v334
        %v351 = vpack.c.bf16 %v343, %v335
        %v352 = vpack.c.bf16 %v344, %v336
        %v353 = vpack.c.bf16 %v345, %v337
        %v354 = vpack.c.bf16 %v346, %v338
        %v355 = vpack.c.bf16 %v347, %v339
        %v356 = vpack.c.bf16 %v348, %v340
        %v357 = vld [vmem:[%s267] sm:$0xff]
        %v358 = vld [vmem:[%s267 + $0x8] sm:$0xff]
        %v359 = vld [vmem:[%s267 + $0x10] sm:$0xff]
        %v360 = vld [vmem:[%s267 + $0x18] sm:$0xff]
        %v361 = vld [vmem:[%s267 + $0x20] sm:$0xff]
        %v362 = vld [vmem:[%s267 + $0x28] sm:$0xff]
        %v363 = vld [vmem:[%s267 + $0x30] sm:$0xff]
        %v364 = vld [vmem:[%s267 + $0x38] sm:$0xff]
        %v365 = vld [vmem:[%s267 + $0x40] sm:$0xff]
        %v366 = vld [vmem:[%s267 + $0x48] sm:$0xff]
        %v367 = vld [vmem:[%s267 + $0x50] sm:$0xff]
        %v368 = vld [vmem:[%s267 + $0x58] sm:$0xff]
        %v369 = vld [vmem:[%s267 + $0x60] sm:$0xff]
        %v370 = vld [vmem:[%s267 + $0x68] sm:$0xff]
        %v371 = vld [vmem:[%s267 + $0x70] sm:$0xff]
        %v372 = vld [vmem:[%s267 + $0x78] sm:$0xff]
        %v373 = vld [vmem:[%s267 + $0x80] sm:$0xff]
        %v374 = vld [vmem:[%s267 + $0x88] sm:$0xff]
        %v375 = vld [vmem:[%s267 + $0x90] sm:$0xff]
        %v376 = vld [vmem:[%s267 + $0x98] sm:$0xff]
        %v377 = vld [vmem:[%s267 + $0xa0] sm:$0xff]
        %v378 = vld [vmem:[%s267 + $0xa8] sm:$0xff]
        %v379 = vld [vmem:[%s267 + $0xb0] sm:$0xff]
        %v380 = vld [vmem:[%s267 + $0xb8] sm:$0xff]
        %v381 = vld [vmem:[%s267 + $0xc0] sm:$0xff]
        %v382 = vld [vmem:[%s267 + $0xc8] sm:$0xff]
        %v383 = vld [vmem:[%s267 + $0xd0] sm:$0xff]
        %v384 = vld [vmem:[%s267 + $0xd8] sm:$0xff]
        %v385 = vld [vmem:[%s267 + $0xe0] sm:$0xff]
        %v386 = vld [vmem:[%s267 + $0xe8] sm:$0xff]
        %v387 = vld [vmem:[%s267 + $0xf0] sm:$0xff]
        %v388 = vld [vmem:[%s267 + $0xf8] sm:$0xff]
        %v389 = vld [vmem:[%s267 + $0x100] sm:$0xff]
        %v390 = vld [vmem:[%s267 + $0x108] sm:$0xff]
        %v391 = vld [vmem:[%s267 + $0x110] sm:$0xff]
        %v392 = vld [vmem:[%s267 + $0x118] sm:$0xff]
        %v393 = vld [vmem:[%s267 + $0x120] sm:$0xff]
        %v394 = vld [vmem:[%s267 + $0x128] sm:$0xff]
        %v395 = vld [vmem:[%s267 + $0x130] sm:$0xff]
        %v396 = vld [vmem:[%s267 + $0x138] sm:$0xff]
        %v397 = vld [vmem:[%s267 + $0x140] sm:$0xff]
        %v398 = vld [vmem:[%s267 + $0x148] sm:$0xff]
        %v399 = vld [vmem:[%s267 + $0x150] sm:$0xff]
        %v400 = vld [vmem:[%s267 + $0x158] sm:$0xff]
        %v401 = vld [vmem:[%s267 + $0x160] sm:$0xff]
        %v402 = vld [vmem:[%s267 + $0x168] sm:$0xff]
        %v403 = vld [vmem:[%s267 + $0x170] sm:$0xff]
        %v404 = vld [vmem:[%s267 + $0x178] sm:$0xff]
        %v405 = vld [vmem:[%s267 + $0x180] sm:$0xff]
        %v406 = vld [vmem:[%s267 + $0x188] sm:$0xff]
        %v407 = vld [vmem:[%s267 + $0x190] sm:$0xff]
        %v408 = vld [vmem:[%s267 + $0x198] sm:$0xff]
        %v409 = vld [vmem:[%s267 + $0x1a0] sm:$0xff]
        %v410 = vld [vmem:[%s267 + $0x1a8] sm:$0xff]
        %v411 = vld [vmem:[%s267 + $0x1b0] sm:$0xff]
        %v412 = vld [vmem:[%s267 + $0x1b8] sm:$0xff]
        %v413 = vld [vmem:[%s267 + $0x1c0] sm:$0xff]
        %v414 = vld [vmem:[%s267 + $0x1c8] sm:$0xff]
        %v415 = vld [vmem:[%s267 + $0x1d0] sm:$0xff]
        %v416 = vld [vmem:[%s267 + $0x1d8] sm:$0xff]
        %v417 = vld [vmem:[%s267 + $0x1e0] sm:$0xff]
        %v418 = vld [vmem:[%s267 + $0x1e8] sm:$0xff]
        %v419 = vld [vmem:[%s267 + $0x1f0] sm:$0xff]
        %v420 = vld [vmem:[%s267 + $0x1f8] sm:$0xff]
        %v421 = vld [vmem:[%s267 + $0x200] sm:$0xff]
        %v422 = vld [vmem:[%s267 + $0x208] sm:$0xff]
        %v423 = vld [vmem:[%s267 + $0x210] sm:$0xff]
        %v424 = vld [vmem:[%s267 + $0x218] sm:$0xff]
        %v425 = vld [vmem:[%s267 + $0x220] sm:$0xff]
        %v426 = vld [vmem:[%s267 + $0x228] sm:$0xff]
        %v427 = vld [vmem:[%s267 + $0x230] sm:$0xff]
        %v428 = vld [vmem:[%s267 + $0x238] sm:$0xff]
        %v429 = vld [vmem:[%s267 + $0x240] sm:$0xff]
        %v430 = vld [vmem:[%s267 + $0x248] sm:$0xff]
        %v431 = vld [vmem:[%s267 + $0x250] sm:$0xff]
        %v432 = vld [vmem:[%s267 + $0x258] sm:$0xff]
        %v433 = vld [vmem:[%s267 + $0x260] sm:$0xff]
        %v434 = vld [vmem:[%s267 + $0x268] sm:$0xff]
        %v435 = vld [vmem:[%s267 + $0x270] sm:$0xff]
        %v436 = vld [vmem:[%s267 + $0x278] sm:$0xff]
        %v437 = vld [vmem:[%s267 + $0x280] sm:$0xff]
        %v438 = vld [vmem:[%s267 + $0x288] sm:$0xff]
        %v439 = vld [vmem:[%s267 + $0x290] sm:$0xff]
        %v440 = vld [vmem:[%s267 + $0x298] sm:$0xff]
        %v441 = vld [vmem:[%s267 + $0x2a0] sm:$0xff]
        %v442 = vld [vmem:[%s267 + $0x2a8] sm:$0xff]
        %v443 = vld [vmem:[%s267 + $0x2b0] sm:$0xff]
        %v444 = vld [vmem:[%s267 + $0x2b8] sm:$0xff]
        %v445 = vld [vmem:[%s267 + $0x2c0] sm:$0xff]
        %v446 = vld [vmem:[%s267 + $0x2c8] sm:$0xff]
        %v447 = vld [vmem:[%s267 + $0x2d0] sm:$0xff]
        %v448 = vld [vmem:[%s267 + $0x2d8] sm:$0xff]
        %v449 = vld [vmem:[%s267 + $0x2e0] sm:$0xff]
        %v450 = vld [vmem:[%s267 + $0x2e8] sm:$0xff]
        %v451 = vld [vmem:[%s267 + $0x2f0] sm:$0xff]
        %v452 = vld [vmem:[%s267 + $0x2f8] sm:$0xff]
        %v453 = vld [vmem:[%s267 + $0x300] sm:$0xff]
        %v454 = vld [vmem:[%s267 + $0x308] sm:$0xff]
        %v455 = vld [vmem:[%s267 + $0x310] sm:$0xff]
        %v456 = vld [vmem:[%s267 + $0x318] sm:$0xff]
        %v457 = vld [vmem:[%s267 + $0x320] sm:$0xff]
        %v458 = vld [vmem:[%s267 + $0x328] sm:$0xff]
        %v459 = vld [vmem:[%s267 + $0x330] sm:$0xff]
        %v460 = vld [vmem:[%s267 + $0x338] sm:$0xff]
        %v461 = vld [vmem:[%s267 + $0x340] sm:$0xff]
        %v462 = vld [vmem:[%s267 + $0x348] sm:$0xff]
        %v463 = vld [vmem:[%s267 + $0x350] sm:$0xff]
        %v464 = vld [vmem:[%s267 + $0x358] sm:$0xff]
        %v465 = vld [vmem:[%s267 + $0x360] sm:$0xff]
        %v466 = vld [vmem:[%s267 + $0x368] sm:$0xff]
        %v467 = vld [vmem:[%s267 + $0x370] sm:$0xff]
        %v468 = vld [vmem:[%s267 + $0x378] sm:$0xff]
        %v469 = vld [vmem:[%s267 + $0x380] sm:$0xff]
        %v470 = vld [vmem:[%s267 + $0x388] sm:$0xff]
        %v471 = vld [vmem:[%s267 + $0x390] sm:$0xff]
        %v472 = vld [vmem:[%s267 + $0x398] sm:$0xff]
        %v473 = vld [vmem:[%s267 + $0x3a0] sm:$0xff]
        %v474 = vld [vmem:[%s267 + $0x3a8] sm:$0xff]
        %v475 = vld [vmem:[%s267 + $0x3b0] sm:$0xff]
        %v476 = vld [vmem:[%s267 + $0x3b8] sm:$0xff]
        %v477 = vld [vmem:[%s267 + $0x3c0] sm:$0xff]
        %v478 = vld [vmem:[%s267 + $0x3c8] sm:$0xff]
        %v479 = vld [vmem:[%s267 + $0x3d0] sm:$0xff]
        %v480 = vld [vmem:[%s267 + $0x3d8] sm:$0xff]
        %v481 = vld [vmem:[%s267 + $0x3e0] sm:$0xff]
        %v482 = vld [vmem:[%s267 + $0x3e8] sm:$0xff]
        %v483 = vld [vmem:[%s267 + $0x3f0] sm:$0xff]
        %v484 = vld [vmem:[%s267 + $0x3f8] sm:$0xff]
        %v485 = vld [vmem:[%s267 + $0x400] sm:$0xff]
        %v486 = vld [vmem:[%s267 + $0x408] sm:$0xff]
        %v487 = vld [vmem:[%s267 + $0x410] sm:$0xff]
        %v488 = vld [vmem:[%s267 + $0x418] sm:$0xff]
        %v489 = vld [vmem:[%s267 + $0x420] sm:$0xff]
        %v490 = vld [vmem:[%s267 + $0x428] sm:$0xff]
        %v491 = vld [vmem:[%s267 + $0x430] sm:$0xff]
        %v492 = vld [vmem:[%s267 + $0x438] sm:$0xff]
        %v493 = vld [vmem:[%s267 + $0x440] sm:$0xff]
        %v494 = vld [vmem:[%s267 + $0x448] sm:$0xff]
        %v495 = vld [vmem:[%s267 + $0x450] sm:$0xff]
        %v496 = vld [vmem:[%s267 + $0x458] sm:$0xff]
        %v497 = vld [vmem:[%s267 + $0x460] sm:$0xff]
        %v498 = vld [vmem:[%s267 + $0x468] sm:$0xff]
        %v499 = vld [vmem:[%s267 + $0x470] sm:$0xff]
        %v500 = vld [vmem:[%s267 + $0x478] sm:$0xff]
        %v501 = vld [vmem:[%s267 + $0x480] sm:$0xff]
        %v502 = vld [vmem:[%s267 + $0x488] sm:$0xff]
        %v503 = vld [vmem:[%s267 + $0x490] sm:$0xff]
        %v504 = vld [vmem:[%s267 + $0x498] sm:$0xff]
        %v505 = vld [vmem:[%s267 + $0x4a0] sm:$0xff]
        %v506 = vld [vmem:[%s267 + $0x4a8] sm:$0xff]
        %v507 = vld [vmem:[%s267 + $0x4b0] sm:$0xff]
        %v508 = vld [vmem:[%s267 + $0x4b8] sm:$0xff]
        %v509 = vld [vmem:[%s267 + $0x4c0] sm:$0xff]
        %v510 = vld [vmem:[%s267 + $0x4c8] sm:$0xff]
        %v511 = vld [vmem:[%s267 + $0x4d0] sm:$0xff]
        %v512 = vld [vmem:[%s267 + $0x4d8] sm:$0xff]
        %v513 = vld [vmem:[%s267 + $0x4e0] sm:$0xff]
        %v514 = vld [vmem:[%s267 + $0x4e8] sm:$0xff]
        %v515 = vld [vmem:[%s267 + $0x4f0] sm:$0xff]
        %v516 = vld [vmem:[%s267 + $0x4f8] sm:$0xff]
        %v517 = vld [vmem:[%s267 + $0x500] sm:$0xff]
        %v518 = vld [vmem:[%s267 + $0x508] sm:$0xff]
        %v519 = vld [vmem:[%s267 + $0x510] sm:$0xff]
        %v520 = vld [vmem:[%s267 + $0x518] sm:$0xff]
        %v521 = vld [vmem:[%s267 + $0x520] sm:$0xff]
        %v522 = vld [vmem:[%s267 + $0x528] sm:$0xff]
        %v523 = vld [vmem:[%s267 + $0x530] sm:$0xff]
        %v524 = vld [vmem:[%s267 + $0x538] sm:$0xff]
        %v525 = vld [vmem:[%s267 + $0x540] sm:$0xff]
        %v526 = vld [vmem:[%s267 + $0x548] sm:$0xff]
        %v527 = vld [vmem:[%s267 + $0x550] sm:$0xff]
        %v528 = vld [vmem:[%s267 + $0x558] sm:$0xff]
        %v529 = vld [vmem:[%s267 + $0x560] sm:$0xff]
        %v530 = vld [vmem:[%s267 + $0x568] sm:$0xff]
        %v531 = vld [vmem:[%s267 + $0x570] sm:$0xff]
        %v532 = vld [vmem:[%s267 + $0x578] sm:$0xff]
        %v533 = vld [vmem:[%s267 + $0x580] sm:$0xff]
        %v534 = vld [vmem:[%s267 + $0x588] sm:$0xff]
        %v535 = vld [vmem:[%s267 + $0x590] sm:$0xff]
        %v536 = vld [vmem:[%s267 + $0x598] sm:$0xff]
        %v537 = vld [vmem:[%s267 + $0x5a0] sm:$0xff]
        %v538 = vld [vmem:[%s267 + $0x5a8] sm:$0xff]
        %v539 = vld [vmem:[%s267 + $0x5b0] sm:$0xff]
        %v540 = vld [vmem:[%s267 + $0x5b8] sm:$0xff]
        %v541 = vld [vmem:[%s267 + $0x5c0] sm:$0xff]
        %v542 = vld [vmem:[%s267 + $0x5c8] sm:$0xff]
        %v543 = vld [vmem:[%s267 + $0x5d0] sm:$0xff]
        %v544 = vld [vmem:[%s267 + $0x5d8] sm:$0xff]
        %v545 = vld [vmem:[%s267 + $0x5e0] sm:$0xff]
        %v546 = vld [vmem:[%s267 + $0x5e8] sm:$0xff]
        %v547 = vld [vmem:[%s267 + $0x5f0] sm:$0xff]
        %v548 = vld [vmem:[%s267 + $0x5f8] sm:$0xff]
        %v549 = vld [vmem:[%s267 + $0x600] sm:$0xff]
        %v550 = vld [vmem:[%s267 + $0x608] sm:$0xff]
        %v551 = vld [vmem:[%s267 + $0x610] sm:$0xff]
        %v552 = vld [vmem:[%s267 + $0x618] sm:$0xff]
        %v553 = vld [vmem:[%s267 + $0x620] sm:$0xff]
        %v554 = vld [vmem:[%s267 + $0x628] sm:$0xff]
        %v555 = vld [vmem:[%s267 + $0x630] sm:$0xff]
        %v556 = vld [vmem:[%s267 + $0x638] sm:$0xff]
        %v557 = vld [vmem:[%s267 + $0x640] sm:$0xff]
        %v558 = vld [vmem:[%s267 + $0x648] sm:$0xff]
        %v559 = vld [vmem:[%s267 + $0x650] sm:$0xff]
        %v560 = vld [vmem:[%s267 + $0x658] sm:$0xff]
        %v561 = vld [vmem:[%s267 + $0x660] sm:$0xff]
        %v562 = vld [vmem:[%s267 + $0x668] sm:$0xff]
        %v563 = vld [vmem:[%s267 + $0x670] sm:$0xff]
        %v564 = vld [vmem:[%s267 + $0x678] sm:$0xff]
        %v565 = vld [vmem:[%s267 + $0x680] sm:$0xff]
        %v566 = vld [vmem:[%s267 + $0x688] sm:$0xff]
        %v567 = vld [vmem:[%s267 + $0x690] sm:$0xff]
        %v568 = vld [vmem:[%s267 + $0x698] sm:$0xff]
        %v569 = vld [vmem:[%s267 + $0x6a0] sm:$0xff]
        %v570 = vld [vmem:[%s267 + $0x6a8] sm:$0xff]
        %v571 = vld [vmem:[%s267 + $0x6b0] sm:$0xff]
        %v572 = vld [vmem:[%s267 + $0x6b8] sm:$0xff]
        %v573 = vld [vmem:[%s267 + $0x6c0] sm:$0xff]
        %v574 = vld [vmem:[%s267 + $0x6c8] sm:$0xff]
        %v575 = vld [vmem:[%s267 + $0x6d0] sm:$0xff]
        %v576 = vld [vmem:[%s267 + $0x6d8] sm:$0xff]
        %v577 = vld [vmem:[%s267 + $0x6e0] sm:$0xff]
        %v578 = vld [vmem:[%s267 + $0x6e8] sm:$0xff]
        %v579 = vld [vmem:[%s267 + $0x6f0] sm:$0xff]
        %v580 = vld [vmem:[%s267 + $0x6f8] sm:$0xff]
        %v581 = vld [vmem:[%s267 + $0x700] sm:$0xff]
        %v582 = vld [vmem:[%s267 + $0x708] sm:$0xff]
        %v583 = vld [vmem:[%s267 + $0x710] sm:$0xff]
        %v584 = vld [vmem:[%s267 + $0x718] sm:$0xff]
        %v585 = vld [vmem:[%s267 + $0x720] sm:$0xff]
        %v586 = vld [vmem:[%s267 + $0x728] sm:$0xff]
        %v587 = vld [vmem:[%s267 + $0x730] sm:$0xff]
        %v588 = vld [vmem:[%s267 + $0x738] sm:$0xff]
        %v589 = vld [vmem:[%s267 + $0x740] sm:$0xff]
        %v590 = vld [vmem:[%s267 + $0x748] sm:$0xff]
        %v591 = vld [vmem:[%s267 + $0x750] sm:$0xff]
        %v592 = vld [vmem:[%s267 + $0x758] sm:$0xff]
        %v593 = vld [vmem:[%s267 + $0x760] sm:$0xff]
        %v594 = vld [vmem:[%s267 + $0x768] sm:$0xff]
        %v595 = vld [vmem:[%s267 + $0x770] sm:$0xff]
        %v596 = vld [vmem:[%s267 + $0x778] sm:$0xff]
        %v597 = vld [vmem:[%s267 + $0x780] sm:$0xff]
        %v598 = vld [vmem:[%s267 + $0x788] sm:$0xff]
        %v599 = vld [vmem:[%s267 + $0x790] sm:$0xff]
        %v600 = vld [vmem:[%s267 + $0x798] sm:$0xff]
        %v601 = vld [vmem:[%s267 + $0x7a0] sm:$0xff]
        %v602 = vld [vmem:[%s267 + $0x7a8] sm:$0xff]
        %v603 = vld [vmem:[%s267 + $0x7b0] sm:$0xff]
        %v604 = vld [vmem:[%s267 + $0x7b8] sm:$0xff]
        %v605 = vld [vmem:[%s267 + $0x7c0] sm:$0xff]
        %v606 = vld [vmem:[%s267 + $0x7c8] sm:$0xff]
        %v607 = vld [vmem:[%s267 + $0x7d0] sm:$0xff]
        %v608 = vld [vmem:[%s267 + $0x7d8] sm:$0xff]
        %v609 = vld [vmem:[%s267 + $0x7e0] sm:$0xff]
        %v610 = vld [vmem:[%s267 + $0x7e8] sm:$0xff]
        %v611 = vld [vmem:[%s267 + $0x7f0] sm:$0xff]
        %v612 = vld [vmem:[%s267 + $0x7f8] sm:$0xff]
        %v869 = vunpack.c.l.b16 %v357
        %v870 = vunpack.c.h.b16 %v357
        %v871 = vunpack.c.l.b16 %v358
        %v872 = vunpack.c.h.b16 %v358
        %v873 = vunpack.c.l.b16 %v359
        %v874 = vunpack.c.h.b16 %v359
        %v875 = vunpack.c.l.b16 %v360
        %v876 = vunpack.c.h.b16 %v360
        %v877 = vunpack.c.l.b16 %v361
        %v878 = vunpack.c.h.b16 %v361
        %v879 = vunpack.c.l.b16 %v362
        %v880 = vunpack.c.h.b16 %v362
        %v881 = vunpack.c.l.b16 %v363
        %v882 = vunpack.c.h.b16 %v363
        %v883 = vunpack.c.l.b16 %v364
        %v884 = vunpack.c.h.b16 %v364
        %v885 = vunpack.c.l.b16 %v365
        %v886 = vunpack.c.h.b16 %v365
        %v887 = vunpack.c.l.b16 %v366
        %v888 = vunpack.c.h.b16 %v366
        %v889 = vunpack.c.l.b16 %v367
        %v890 = vunpack.c.h.b16 %v367
        %v891 = vunpack.c.l.b16 %v368
        %v892 = vunpack.c.h.b16 %v368
        %v893 = vunpack.c.l.b16 %v369
        %v894 = vunpack.c.h.b16 %v369
        %v895 = vunpack.c.l.b16 %v370
        %v896 = vunpack.c.h.b16 %v370
        %v897 = vunpack.c.l.b16 %v371
        %v898 = vunpack.c.h.b16 %v371
        %v899 = vunpack.c.l.b16 %v372
        %v900 = vunpack.c.h.b16 %v372
        %v901 = vunpack.c.l.b16 %v373
        %v902 = vunpack.c.h.b16 %v373
        %v903 = vunpack.c.l.b16 %v374
        %v904 = vunpack.c.h.b16 %v374
        %v905 = vunpack.c.l.b16 %v375
        %v906 = vunpack.c.h.b16 %v375
        %v907 = vunpack.c.l.b16 %v376
        %v908 = vunpack.c.h.b16 %v376
        %v909 = vunpack.c.l.b16 %v377
        %v910 = vunpack.c.h.b16 %v377
        %v911 = vunpack.c.l.b16 %v378
        %v912 = vunpack.c.h.b16 %v378
        %v913 = vunpack.c.l.b16 %v379
        %v914 = vunpack.c.h.b16 %v379
        %v915 = vunpack.c.l.b16 %v380
        %v916 = vunpack.c.h.b16 %v380
        %v917 = vunpack.c.l.b16 %v381
        %v918 = vunpack.c.h.b16 %v381
        %v919 = vunpack.c.l.b16 %v382
        %v920 = vunpack.c.h.b16 %v382
        %v921 = vunpack.c.l.b16 %v383
        %v922 = vunpack.c.h.b16 %v383
        %v923 = vunpack.c.l.b16 %v384
        %v924 = vunpack.c.h.b16 %v384
        %v925 = vunpack.c.l.b16 %v385
        %v926 = vunpack.c.h.b16 %v385
        %v927 = vunpack.c.l.b16 %v386
        %v928 = vunpack.c.h.b16 %v386
        %v929 = vunpack.c.l.b16 %v387
        %v930 = vunpack.c.h.b16 %v387
        %v931 = vunpack.c.l.b16 %v388
        %v932 = vunpack.c.h.b16 %v388
        %v933 = vunpack.c.l.b16 %v389
        %v934 = vunpack.c.h.b16 %v389
        %v935 = vunpack.c.l.b16 %v390
        %v936 = vunpack.c.h.b16 %v390
        %v937 = vunpack.c.l.b16 %v391
        %v938 = vunpack.c.h.b16 %v391
        %v939 = vunpack.c.l.b16 %v392
        %v940 = vunpack.c.h.b16 %v392
        %v941 = vunpack.c.l.b16 %v393
        %v942 = vunpack.c.h.b16 %v393
        %v943 = vunpack.c.l.b16 %v394
        %v944 = vunpack.c.h.b16 %v394
        %v945 = vunpack.c.l.b16 %v395
        %v946 = vunpack.c.h.b16 %v395
        %v947 = vunpack.c.l.b16 %v396
        %v948 = vunpack.c.h.b16 %v396
        %v949 = vunpack.c.l.b16 %v397
        %v950 = vunpack.c.h.b16 %v397
        %v951 = vunpack.c.l.b16 %v398
        %v952 = vunpack.c.h.b16 %v398
        %v953 = vunpack.c.l.b16 %v399
        %v954 = vunpack.c.h.b16 %v399
        %v955 = vunpack.c.l.b16 %v400
        %v956 = vunpack.c.h.b16 %v400
        %v957 = vunpack.c.l.b16 %v401
        %v958 = vunpack.c.h.b16 %v401
        %v959 = vunpack.c.l.b16 %v402
        %v960 = vunpack.c.h.b16 %v402
        %v961 = vunpack.c.l.b16 %v403
        %v962 = vunpack.c.h.b16 %v403
        %v963 = vunpack.c.l.b16 %v404
        %v964 = vunpack.c.h.b16 %v404
        %v965 = vunpack.c.l.b16 %v405
        %v966 = vunpack.c.h.b16 %v405
        %v967 = vunpack.c.l.b16 %v406
        %v968 = vunpack.c.h.b16 %v406
        %v969 = vunpack.c.l.b16 %v407
        %v970 = vunpack.c.h.b16 %v407
        %v971 = vunpack.c.l.b16 %v408
        %v972 = vunpack.c.h.b16 %v408
        %v973 = vunpack.c.l.b16 %v409
        %v974 = vunpack.c.h.b16 %v409
        %v975 = vunpack.c.l.b16 %v410
        %v976 = vunpack.c.h.b16 %v410
        %v977 = vunpack.c.l.b16 %v411
        %v978 = vunpack.c.h.b16 %v411
        %v979 = vunpack.c.l.b16 %v412
        %v980 = vunpack.c.h.b16 %v412
        %v981 = vunpack.c.l.b16 %v413
        %v982 = vunpack.c.h.b16 %v413
        %v983 = vunpack.c.l.b16 %v414
        %v984 = vunpack.c.h.b16 %v414
        %v985 = vunpack.c.l.b16 %v415
        %v986 = vunpack.c.h.b16 %v415
        %v987 = vunpack.c.l.b16 %v416
        %v988 = vunpack.c.h.b16 %v416
        %v989 = vunpack.c.l.b16 %v417
        %v990 = vunpack.c.h.b16 %v417
        %v991 = vunpack.c.l.b16 %v418
        %v992 = vunpack.c.h.b16 %v418
        %v993 = vunpack.c.l.b16 %v419
        %v994 = vunpack.c.h.b16 %v419
        %v995 = vunpack.c.l.b16 %v420
        %v996 = vunpack.c.h.b16 %v420
        %v997 = vunpack.c.l.b16 %v421
        %v998 = vunpack.c.h.b16 %v421
        %v999 = vunpack.c.l.b16 %v422
        %v1000 = vunpack.c.h.b16 %v422
        %v1001 = vunpack.c.l.b16 %v423
        %v1002 = vunpack.c.h.b16 %v423
        %v1003 = vunpack.c.l.b16 %v424
        %v1004 = vunpack.c.h.b16 %v424
        %v1005 = vunpack.c.l.b16 %v425
        %v1006 = vunpack.c.h.b16 %v425
        %v1007 = vunpack.c.l.b16 %v426
        %v1008 = vunpack.c.h.b16 %v426
        %v1009 = vunpack.c.l.b16 %v427
        %v1010 = vunpack.c.h.b16 %v427
        %v1011 = vunpack.c.l.b16 %v428
        %v1012 = vunpack.c.h.b16 %v428
        %v1013 = vunpack.c.l.b16 %v429
        %v1014 = vunpack.c.h.b16 %v429
        %v1015 = vunpack.c.l.b16 %v430
        %v1016 = vunpack.c.h.b16 %v430
        %v1017 = vunpack.c.l.b16 %v431
        %v1018 = vunpack.c.h.b16 %v431
        %v1019 = vunpack.c.l.b16 %v432
        %v1020 = vunpack.c.h.b16 %v432
        %v1021 = vunpack.c.l.b16 %v433
        %v1022 = vunpack.c.h.b16 %v433
        %v1023 = vunpack.c.l.b16 %v434
        %v1024 = vunpack.c.h.b16 %v434
        %v1025 = vunpack.c.l.b16 %v435
        %v1026 = vunpack.c.h.b16 %v435
        %v1027 = vunpack.c.l.b16 %v436
        %v1028 = vunpack.c.h.b16 %v436
        %v1029 = vunpack.c.l.b16 %v437
        %v1030 = vunpack.c.h.b16 %v437
        %v1031 = vunpack.c.l.b16 %v438
        %v1032 = vunpack.c.h.b16 %v438
        %v1033 = vunpack.c.l.b16 %v439
        %v1034 = vunpack.c.h.b16 %v439
        %v1035 = vunpack.c.l.b16 %v440
        %v1036 = vunpack.c.h.b16 %v440
        %v1037 = vunpack.c.l.b16 %v441
        %v1038 = vunpack.c.h.b16 %v441
        %v1039 = vunpack.c.l.b16 %v442
        %v1040 = vunpack.c.h.b16 %v442
        %v1041 = vunpack.c.l.b16 %v443
        %v1042 = vunpack.c.h.b16 %v443
        %v1043 = vunpack.c.l.b16 %v444
        %v1044 = vunpack.c.h.b16 %v444
        %v1045 = vunpack.c.l.b16 %v445
        %v1046 = vunpack.c.h.b16 %v445
        %v1047 = vunpack.c.l.b16 %v446
        %v1048 = vunpack.c.h.b16 %v446
        %v1049 = vunpack.c.l.b16 %v447
        %v1050 = vunpack.c.h.b16 %v447
        %v1051 = vunpack.c.l.b16 %v448
        %v1052 = vunpack.c.h.b16 %v448
        %v1053 = vunpack.c.l.b16 %v449
        %v1054 = vunpack.c.h.b16 %v449
        %v1055 = vunpack.c.l.b16 %v450
        %v1056 = vunpack.c.h.b16 %v450
        %v1057 = vunpack.c.l.b16 %v451
        %v1058 = vunpack.c.h.b16 %v451
        %v1059 = vunpack.c.l.b16 %v452
        %v1060 = vunpack.c.h.b16 %v452
        %v1061 = vunpack.c.l.b16 %v453
        %v1062 = vunpack.c.h.b16 %v453
        %v1063 = vunpack.c.l.b16 %v454
        %v1064 = vunpack.c.h.b16 %v454
        %v1065 = vunpack.c.l.b16 %v455
        %v1066 = vunpack.c.h.b16 %v455
        %v1067 = vunpack.c.l.b16 %v456
        %v1068 = vunpack.c.h.b16 %v456
        %v1069 = vunpack.c.l.b16 %v457
        %v1070 = vunpack.c.h.b16 %v457
        %v1071 = vunpack.c.l.b16 %v458
        %v1072 = vunpack.c.h.b16 %v458
        %v1073 = vunpack.c.l.b16 %v459
        %v1074 = vunpack.c.h.b16 %v459
        %v1075 = vunpack.c.l.b16 %v460
        %v1076 = vunpack.c.h.b16 %v460
        %v1077 = vunpack.c.l.b16 %v461
        %v1078 = vunpack.c.h.b16 %v461
        %v1079 = vunpack.c.l.b16 %v462
        %v1080 = vunpack.c.h.b16 %v462
        %v1081 = vunpack.c.l.b16 %v463
        %v1082 = vunpack.c.h.b16 %v463
        %v1083 = vunpack.c.l.b16 %v464
        %v1084 = vunpack.c.h.b16 %v464
        %v1085 = vunpack.c.l.b16 %v465
        %v1086 = vunpack.c.h.b16 %v465
        %v1087 = vunpack.c.l.b16 %v466
        %v1088 = vunpack.c.h.b16 %v466
        %v1089 = vunpack.c.l.b16 %v467
        %v1090 = vunpack.c.h.b16 %v467
        %v1091 = vunpack.c.l.b16 %v468
        %v1092 = vunpack.c.h.b16 %v468
        %v1093 = vunpack.c.l.b16 %v469
        %v1094 = vunpack.c.h.b16 %v469
        %v1095 = vunpack.c.l.b16 %v470
        %v1096 = vunpack.c.h.b16 %v470
        %v1097 = vunpack.c.l.b16 %v471
        %v1098 = vunpack.c.h.b16 %v471
        %v1099 = vunpack.c.l.b16 %v472
        %v1100 = vunpack.c.h.b16 %v472
        %v1101 = vunpack.c.l.b16 %v473
        %v1102 = vunpack.c.h.b16 %v473
        %v1103 = vunpack.c.l.b16 %v474
        %v1104 = vunpack.c.h.b16 %v474
        %v1105 = vunpack.c.l.b16 %v475
        %v1106 = vunpack.c.h.b16 %v475
        %v1107 = vunpack.c.l.b16 %v476
        %v1108 = vunpack.c.h.b16 %v476
        %v1109 = vunpack.c.l.b16 %v477
        %v1110 = vunpack.c.h.b16 %v477
        %v1111 = vunpack.c.l.b16 %v478
        %v1112 = vunpack.c.h.b16 %v478
        %v1113 = vunpack.c.l.b16 %v479
        %v1114 = vunpack.c.h.b16 %v479
        %v1115 = vunpack.c.l.b16 %v480
        %v1116 = vunpack.c.h.b16 %v480
        %v1117 = vunpack.c.l.b16 %v481
        %v1118 = vunpack.c.h.b16 %v481
        %v1119 = vunpack.c.l.b16 %v482
        %v1120 = vunpack.c.h.b16 %v482
        %v1121 = vunpack.c.l.b16 %v483
        %v1122 = vunpack.c.h.b16 %v483
        %v1123 = vunpack.c.l.b16 %v484
        %v1124 = vunpack.c.h.b16 %v484
        %v1125 = vunpack.c.l.b16 %v485
        %v1126 = vunpack.c.h.b16 %v485
        %v1127 = vunpack.c.l.b16 %v486
        %v1128 = vunpack.c.h.b16 %v486
        %v1129 = vunpack.c.l.b16 %v487
        %v1130 = vunpack.c.h.b16 %v487
        %v1131 = vunpack.c.l.b16 %v488
        %v1132 = vunpack.c.h.b16 %v488
        %v1133 = vunpack.c.l.b16 %v489
        %v1134 = vunpack.c.h.b16 %v489
        %v1135 = vunpack.c.l.b16 %v490
        %v1136 = vunpack.c.h.b16 %v490
        %v1137 = vunpack.c.l.b16 %v491
        %v1138 = vunpack.c.h.b16 %v491
        %v1139 = vunpack.c.l.b16 %v492
        %v1140 = vunpack.c.h.b16 %v492
        %v1141 = vunpack.c.l.b16 %v493
        %v1142 = vunpack.c.h.b16 %v493
        %v1143 = vunpack.c.l.b16 %v494
        %v1144 = vunpack.c.h.b16 %v494
        %v1145 = vunpack.c.l.b16 %v495
        %v1146 = vunpack.c.h.b16 %v495
        %v1147 = vunpack.c.l.b16 %v496
        %v1148 = vunpack.c.h.b16 %v496
        %v1149 = vunpack.c.l.b16 %v497
        %v1150 = vunpack.c.h.b16 %v497
        %v1151 = vunpack.c.l.b16 %v498
        %v1152 = vunpack.c.h.b16 %v498
        %v1153 = vunpack.c.l.b16 %v499
        %v1154 = vunpack.c.h.b16 %v499
        %v1155 = vunpack.c.l.b16 %v500
        %v1156 = vunpack.c.h.b16 %v500
        %v1157 = vunpack.c.l.b16 %v501
        %v1158 = vunpack.c.h.b16 %v501
        %v1159 = vunpack.c.l.b16 %v502
        %v1160 = vunpack.c.h.b16 %v502
        %v1161 = vunpack.c.l.b16 %v503
        %v1162 = vunpack.c.h.b16 %v503
        %v1163 = vunpack.c.l.b16 %v504
        %v1164 = vunpack.c.h.b16 %v504
        %v1165 = vunpack.c.l.b16 %v505
        %v1166 = vunpack.c.h.b16 %v505
        %v1167 = vunpack.c.l.b16 %v506
        %v1168 = vunpack.c.h.b16 %v506
        %v1169 = vunpack.c.l.b16 %v507
        %v1170 = vunpack.c.h.b16 %v507
        %v1171 = vunpack.c.l.b16 %v508
        %v1172 = vunpack.c.h.b16 %v508
        %v1173 = vunpack.c.l.b16 %v509
        %v1174 = vunpack.c.h.b16 %v509
        %v1175 = vunpack.c.l.b16 %v510
        %v1176 = vunpack.c.h.b16 %v510
        %v1177 = vunpack.c.l.b16 %v511
        %v1178 = vunpack.c.h.b16 %v511
        %v1179 = vunpack.c.l.b16 %v512
        %v1180 = vunpack.c.h.b16 %v512
        %v1181 = vunpack.c.l.b16 %v513
        %v1182 = vunpack.c.h.b16 %v513
        %v1183 = vunpack.c.l.b16 %v514
        %v1184 = vunpack.c.h.b16 %v514
        %v1185 = vunpack.c.l.b16 %v515
        %v1186 = vunpack.c.h.b16 %v515
        %v1187 = vunpack.c.l.b16 %v516
        %v1188 = vunpack.c.h.b16 %v516
        %v1189 = vunpack.c.l.b16 %v517
        %v1190 = vunpack.c.h.b16 %v517
        %v1191 = vunpack.c.l.b16 %v518
        %v1192 = vunpack.c.h.b16 %v518
        %v1193 = vunpack.c.l.b16 %v519
        %v1194 = vunpack.c.h.b16 %v519
        %v1195 = vunpack.c.l.b16 %v520
        %v1196 = vunpack.c.h.b16 %v520
        %v1197 = vunpack.c.l.b16 %v521
        %v1198 = vunpack.c.h.b16 %v521
        %v1199 = vunpack.c.l.b16 %v522
        %v1200 = vunpack.c.h.b16 %v522
        %v1201 = vunpack.c.l.b16 %v523
        %v1202 = vunpack.c.h.b16 %v523
        %v1203 = vunpack.c.l.b16 %v524
        %v1204 = vunpack.c.h.b16 %v524
        %v1205 = vunpack.c.l.b16 %v525
        %v1206 = vunpack.c.h.b16 %v525
        %v1207 = vunpack.c.l.b16 %v526
        %v1208 = vunpack.c.h.b16 %v526
        %v1209 = vunpack.c.l.b16 %v527
        %v1210 = vunpack.c.h.b16 %v527
        %v1211 = vunpack.c.l.b16 %v528
        %v1212 = vunpack.c.h.b16 %v528
        %v1213 = vunpack.c.l.b16 %v529
        %v1214 = vunpack.c.h.b16 %v529
        %v1215 = vunpack.c.l.b16 %v530
        %v1216 = vunpack.c.h.b16 %v530
        %v1217 = vunpack.c.l.b16 %v531
        %v1218 = vunpack.c.h.b16 %v531
        %v1219 = vunpack.c.l.b16 %v532
        %v1220 = vunpack.c.h.b16 %v532
        %v1221 = vunpack.c.l.b16 %v533
        %v1222 = vunpack.c.h.b16 %v533
        %v1223 = vunpack.c.l.b16 %v534
        %v1224 = vunpack.c.h.b16 %v534
        %v1225 = vunpack.c.l.b16 %v535
        %v1226 = vunpack.c.h.b16 %v535
        %v1227 = vunpack.c.l.b16 %v536
        %v1228 = vunpack.c.h.b16 %v536
        %v1229 = vunpack.c.l.b16 %v537
        %v1230 = vunpack.c.h.b16 %v537
        %v1231 = vunpack.c.l.b16 %v538
        %v1232 = vunpack.c.h.b16 %v538
        %v1233 = vunpack.c.l.b16 %v539
        %v1234 = vunpack.c.h.b16 %v539
        %v1235 = vunpack.c.l.b16 %v540
        %v1236 = vunpack.c.h.b16 %v540
        %v1237 = vunpack.c.l.b16 %v541
        %v1238 = vunpack.c.h.b16 %v541
        %v1239 = vunpack.c.l.b16 %v542
        %v1240 = vunpack.c.h.b16 %v542
        %v1241 = vunpack.c.l.b16 %v543
        %v1242 = vunpack.c.h.b16 %v543
        %v1243 = vunpack.c.l.b16 %v544
        %v1244 = vunpack.c.h.b16 %v544
        %v1245 = vunpack.c.l.b16 %v545
        %v1246 = vunpack.c.h.b16 %v545
        %v1247 = vunpack.c.l.b16 %v546
        %v1248 = vunpack.c.h.b16 %v546
        %v1249 = vunpack.c.l.b16 %v547
        %v1250 = vunpack.c.h.b16 %v547
        %v1251 = vunpack.c.l.b16 %v548
        %v1252 = vunpack.c.h.b16 %v548
        %v1253 = vunpack.c.l.b16 %v549
        %v1254 = vunpack.c.h.b16 %v549
        %v1255 = vunpack.c.l.b16 %v550
        %v1256 = vunpack.c.h.b16 %v550
        %v1257 = vunpack.c.l.b16 %v551
        %v1258 = vunpack.c.h.b16 %v551
        %v1259 = vunpack.c.l.b16 %v552
        %v1260 = vunpack.c.h.b16 %v552
        %v1261 = vunpack.c.l.b16 %v553
        %v1262 = vunpack.c.h.b16 %v553
        %v1263 = vunpack.c.l.b16 %v554
        %v1264 = vunpack.c.h.b16 %v554
        %v1265 = vunpack.c.l.b16 %v555
        %v1266 = vunpack.c.h.b16 %v555
        %v1267 = vunpack.c.l.b16 %v556
        %v1268 = vunpack.c.h.b16 %v556
        %v1269 = vunpack.c.l.b16 %v557
        %v1270 = vunpack.c.h.b16 %v557
        %v1271 = vunpack.c.l.b16 %v558
        %v1272 = vunpack.c.h.b16 %v558
        %v1273 = vunpack.c.l.b16 %v559
        %v1274 = vunpack.c.h.b16 %v559
        %v1275 = vunpack.c.l.b16 %v560
        %v1276 = vunpack.c.h.b16 %v560
        %v1277 = vunpack.c.l.b16 %v561
        %v1278 = vunpack.c.h.b16 %v561
        %v1279 = vunpack.c.l.b16 %v562
        %v1280 = vunpack.c.h.b16 %v562
        %v1281 = vunpack.c.l.b16 %v563
        %v1282 = vunpack.c.h.b16 %v563
        %v1283 = vunpack.c.l.b16 %v564
        %v1284 = vunpack.c.h.b16 %v564
        %v1285 = vunpack.c.l.b16 %v565
        %v1286 = vunpack.c.h.b16 %v565
        %v1287 = vunpack.c.l.b16 %v566
        %v1288 = vunpack.c.h.b16 %v566
        %v1289 = vunpack.c.l.b16 %v567
        %v1290 = vunpack.c.h.b16 %v567
        %v1291 = vunpack.c.l.b16 %v568
        %v1292 = vunpack.c.h.b16 %v568
        %v1293 = vunpack.c.l.b16 %v569
        %v1294 = vunpack.c.h.b16 %v569
        %v1295 = vunpack.c.l.b16 %v570
        %v1296 = vunpack.c.h.b16 %v570
        %v1297 = vunpack.c.l.b16 %v571
        %v1298 = vunpack.c.h.b16 %v571
        %v1299 = vunpack.c.l.b16 %v572
        %v1300 = vunpack.c.h.b16 %v572
        %v1301 = vunpack.c.l.b16 %v573
        %v1302 = vunpack.c.h.b16 %v573
        %v1303 = vunpack.c.l.b16 %v574
        %v1304 = vunpack.c.h.b16 %v574
        %v1305 = vunpack.c.l.b16 %v575
        %v1306 = vunpack.c.h.b16 %v575
        %v1307 = vunpack.c.l.b16 %v576
        %v1308 = vunpack.c.h.b16 %v576
        %v1309 = vunpack.c.l.b16 %v577
        %v1310 = vunpack.c.h.b16 %v577
        %v1311 = vunpack.c.l.b16 %v578
        %v1312 = vunpack.c.h.b16 %v578
        %v1313 = vunpack.c.l.b16 %v579
        %v1314 = vunpack.c.h.b16 %v579
        %v1315 = vunpack.c.l.b16 %v580
        %v1316 = vunpack.c.h.b16 %v580
        %v1317 = vunpack.c.l.b16 %v581
        %v1318 = vunpack.c.h.b16 %v581
        %v1319 = vunpack.c.l.b16 %v582
        %v1320 = vunpack.c.h.b16 %v582
        %v1321 = vunpack.c.l.b16 %v583
        %v1322 = vunpack.c.h.b16 %v583
        %v1323 = vunpack.c.l.b16 %v584
        %v1324 = vunpack.c.h.b16 %v584
        %v1325 = vunpack.c.l.b16 %v585
        %v1326 = vunpack.c.h.b16 %v585
        %v1327 = vunpack.c.l.b16 %v586
        %v1328 = vunpack.c.h.b16 %v586
        %v1329 = vunpack.c.l.b16 %v587
        %v1330 = vunpack.c.h.b16 %v587
        %v1331 = vunpack.c.l.b16 %v588
        %v1332 = vunpack.c.h.b16 %v588
        %v1333 = vunpack.c.l.b16 %v589
        %v1334 = vunpack.c.h.b16 %v589
        %v1335 = vunpack.c.l.b16 %v590
        %v1336 = vunpack.c.h.b16 %v590
        %v1337 = vunpack.c.l.b16 %v591
        %v1338 = vunpack.c.h.b16 %v591
        %v1339 = vunpack.c.l.b16 %v592
        %v1340 = vunpack.c.h.b16 %v592
        %v1341 = vunpack.c.l.b16 %v593
        %v1342 = vunpack.c.h.b16 %v593
        %v1343 = vunpack.c.l.b16 %v594
        %v1344 = vunpack.c.h.b16 %v594
        %v1345 = vunpack.c.l.b16 %v595
        %v1346 = vunpack.c.h.b16 %v595
        %v1347 = vunpack.c.l.b16 %v596
        %v1348 = vunpack.c.h.b16 %v596
        %v1349 = vunpack.c.l.b16 %v597
        %v1350 = vunpack.c.h.b16 %v597
        %v1351 = vunpack.c.l.b16 %v598
        %v1352 = vunpack.c.h.b16 %v598
        %v1353 = vunpack.c.l.b16 %v599
        %v1354 = vunpack.c.h.b16 %v599
        %v1355 = vunpack.c.l.b16 %v600
        %v1356 = vunpack.c.h.b16 %v600
        %v1357 = vunpack.c.l.b16 %v601
        %v1358 = vunpack.c.h.b16 %v601
        %v1359 = vunpack.c.l.b16 %v602
        %v1360 = vunpack.c.h.b16 %v602
        %v1361 = vunpack.c.l.b16 %v603
        %v1362 = vunpack.c.h.b16 %v603
        %v1363 = vunpack.c.l.b16 %v604
        %v1364 = vunpack.c.h.b16 %v604
        %v1365 = vunpack.c.l.b16 %v605
        %v1366 = vunpack.c.h.b16 %v605
        %v1367 = vunpack.c.l.b16 %v606
        %v1368 = vunpack.c.h.b16 %v606
        %v1369 = vunpack.c.l.b16 %v607
        %v1370 = vunpack.c.h.b16 %v607
        %v1371 = vunpack.c.l.b16 %v608
        %v1372 = vunpack.c.h.b16 %v608
        %v1373 = vunpack.c.l.b16 %v609
        %v1374 = vunpack.c.h.b16 %v609
        %v1375 = vunpack.c.l.b16 %v610
        %v1376 = vunpack.c.h.b16 %v610
        %v1377 = vunpack.c.l.b16 %v611
        %v1378 = vunpack.c.h.b16 %v611
        %v1379 = vunpack.c.l.b16 %v612
        %v1380 = vunpack.c.h.b16 %v612
        %v1381 = vpack.c.b16 %v873, %v869
        %v1382 = vpack.c.b16 %v874, %v870
        %v1383 = vpack.c.b16 %v875, %v871
        %v1384 = vpack.c.b16 %v876, %v872
        %v1385 = vpack.c.b16 %v881, %v877
        %v1386 = vpack.c.b16 %v882, %v878
        %v1387 = vpack.c.b16 %v883, %v879
        %v1388 = vpack.c.b16 %v884, %v880
        %v1389 = vpack.c.b16 %v889, %v885
        %v1390 = vpack.c.b16 %v890, %v886
        %v1391 = vpack.c.b16 %v891, %v887
        %v1392 = vpack.c.b16 %v892, %v888
        %v1393 = vpack.c.b16 %v897, %v893
        %v1394 = vpack.c.b16 %v898, %v894
        %v1395 = vpack.c.b16 %v899, %v895
        %v1396 = vpack.c.b16 %v900, %v896
        %v1397 = vpack.c.b16 %v905, %v901
        %v1398 = vpack.c.b16 %v906, %v902
        %v1399 = vpack.c.b16 %v907, %v903
        %v1400 = vpack.c.b16 %v908, %v904
        %v1401 = vpack.c.b16 %v913, %v909
        %v1402 = vpack.c.b16 %v914, %v910
        %v1403 = vpack.c.b16 %v915, %v911
        %v1404 = vpack.c.b16 %v916, %v912
        %v1405 = vpack.c.b16 %v921, %v917
        %v1406 = vpack.c.b16 %v922, %v918
        %v1407 = vpack.c.b16 %v923, %v919
        %v1408 = vpack.c.b16 %v924, %v920
        %v1409 = vpack.c.b16 %v929, %v925
        %v1410 = vpack.c.b16 %v930, %v926
        %v1411 = vpack.c.b16 %v931, %v927
        %v1412 = vpack.c.b16 %v932, %v928
        %v1413 = vpack.c.b16 %v937, %v933
        %v1414 = vpack.c.b16 %v938, %v934
        %v1415 = vpack.c.b16 %v939, %v935
        %v1416 = vpack.c.b16 %v940, %v936
        %v1417 = vpack.c.b16 %v945, %v941
        %v1418 = vpack.c.b16 %v946, %v942
        %v1419 = vpack.c.b16 %v947, %v943
        %v1420 = vpack.c.b16 %v948, %v944
        %v1421 = vpack.c.b16 %v953, %v949
        %v1422 = vpack.c.b16 %v954, %v950
        %v1423 = vpack.c.b16 %v955, %v951
        %v1424 = vpack.c.b16 %v956, %v952
        %v1425 = vpack.c.b16 %v961, %v957
        %v1426 = vpack.c.b16 %v962, %v958
        %v1427 = vpack.c.b16 %v963, %v959
        %v1428 = vpack.c.b16 %v964, %v960
        %v1429 = vpack.c.b16 %v969, %v965
        %v1430 = vpack.c.b16 %v970, %v966
        %v1431 = vpack.c.b16 %v971, %v967
        %v1432 = vpack.c.b16 %v972, %v968
        %v1433 = vpack.c.b16 %v977, %v973
        %v1434 = vpack.c.b16 %v978, %v974
        %v1435 = vpack.c.b16 %v979, %v975
        %v1436 = vpack.c.b16 %v980, %v976
        %v1437 = vpack.c.b16 %v985, %v981
        %v1438 = vpack.c.b16 %v986, %v982
        %v1439 = vpack.c.b16 %v987, %v983
        %v1440 = vpack.c.b16 %v988, %v984
        %v1441 = vpack.c.b16 %v993, %v989
        %v1442 = vpack.c.b16 %v994, %v990
        %v1443 = vpack.c.b16 %v995, %v991
        %v1444 = vpack.c.b16 %v996, %v992
        %v1445 = vpack.c.b16 %v1001, %v997
        %v1446 = vpack.c.b16 %v1002, %v998
        %v1447 = vpack.c.b16 %v1003, %v999
        %v1448 = vpack.c.b16 %v1004, %v1000
        %v1449 = vpack.c.b16 %v1009, %v1005
        %v1450 = vpack.c.b16 %v1010, %v1006
        %v1451 = vpack.c.b16 %v1011, %v1007
        %v1452 = vpack.c.b16 %v1012, %v1008
        %v1453 = vpack.c.b16 %v1017, %v1013
        %v1454 = vpack.c.b16 %v1018, %v1014
        %v1455 = vpack.c.b16 %v1019, %v1015
        %v1456 = vpack.c.b16 %v1020, %v1016
        %v1457 = vpack.c.b16 %v1025, %v1021
        %v1458 = vpack.c.b16 %v1026, %v1022
        %v1459 = vpack.c.b16 %v1027, %v1023
        %v1460 = vpack.c.b16 %v1028, %v1024
        %v1461 = vpack.c.b16 %v1033, %v1029
        %v1462 = vpack.c.b16 %v1034, %v1030
        %v1463 = vpack.c.b16 %v1035, %v1031
        %v1464 = vpack.c.b16 %v1036, %v1032
        %v1465 = vpack.c.b16 %v1041, %v1037
        %v1466 = vpack.c.b16 %v1042, %v1038
        %v1467 = vpack.c.b16 %v1043, %v1039
        %v1468 = vpack.c.b16 %v1044, %v1040
        %v1469 = vpack.c.b16 %v1049, %v1045
        %v1470 = vpack.c.b16 %v1050, %v1046
        %v1471 = vpack.c.b16 %v1051, %v1047
        %v1472 = vpack.c.b16 %v1052, %v1048
        %v1473 = vpack.c.b16 %v1057, %v1053
        %v1474 = vpack.c.b16 %v1058, %v1054
        %v1475 = vpack.c.b16 %v1059, %v1055
        %v1476 = vpack.c.b16 %v1060, %v1056
        %v1477 = vpack.c.b16 %v1065, %v1061
        %v1478 = vpack.c.b16 %v1066, %v1062
        %v1479 = vpack.c.b16 %v1067, %v1063
        %v1480 = vpack.c.b16 %v1068, %v1064
        %v1481 = vpack.c.b16 %v1073, %v1069
        %v1482 = vpack.c.b16 %v1074, %v1070
        %v1483 = vpack.c.b16 %v1075, %v1071
        %v1484 = vpack.c.b16 %v1076, %v1072
        %v1485 = vpack.c.b16 %v1081, %v1077
        %v1486 = vpack.c.b16 %v1082, %v1078
        %v1487 = vpack.c.b16 %v1083, %v1079
        %v1488 = vpack.c.b16 %v1084, %v1080
        %v1489 = vpack.c.b16 %v1089, %v1085
        %v1490 = vpack.c.b16 %v1090, %v1086
        %v1491 = vpack.c.b16 %v1091, %v1087
        %v1492 = vpack.c.b16 %v1092, %v1088
        %v1493 = vpack.c.b16 %v1097, %v1093
        %v1494 = vpack.c.b16 %v1098, %v1094
        %v1495 = vpack.c.b16 %v1099, %v1095
        %v1496 = vpack.c.b16 %v1100, %v1096
        %v1497 = vpack.c.b16 %v1105, %v1101
        %v1498 = vpack.c.b16 %v1106, %v1102
        %v1499 = vpack.c.b16 %v1107, %v1103
        %v1500 = vpack.c.b16 %v1108, %v1104
        %v1501 = vpack.c.b16 %v1113, %v1109
        %v1502 = vpack.c.b16 %v1114, %v1110
        %v1503 = vpack.c.b16 %v1115, %v1111
        %v1504 = vpack.c.b16 %v1116, %v1112
        %v1505 = vpack.c.b16 %v1121, %v1117
        %v1506 = vpack.c.b16 %v1122, %v1118
        %v1507 = vpack.c.b16 %v1123, %v1119
        %v1508 = vpack.c.b16 %v1124, %v1120
        %v1509 = vpack.c.b16 %v1129, %v1125
        %v1510 = vpack.c.b16 %v1130, %v1126
        %v1511 = vpack.c.b16 %v1131, %v1127
        %v1512 = vpack.c.b16 %v1132, %v1128
        %v1513 = vpack.c.b16 %v1137, %v1133
        %v1514 = vpack.c.b16 %v1138, %v1134
        %v1515 = vpack.c.b16 %v1139, %v1135
        %v1516 = vpack.c.b16 %v1140, %v1136
        %v1517 = vpack.c.b16 %v1145, %v1141
        %v1518 = vpack.c.b16 %v1146, %v1142
        %v1519 = vpack.c.b16 %v1147, %v1143
        %v1520 = vpack.c.b16 %v1148, %v1144
        %v1521 = vpack.c.b16 %v1153, %v1149
        %v1522 = vpack.c.b16 %v1154, %v1150
        %v1523 = vpack.c.b16 %v1155, %v1151
        %v1524 = vpack.c.b16 %v1156, %v1152
        %v1525 = vpack.c.b16 %v1161, %v1157
        %v1526 = vpack.c.b16 %v1162, %v1158
        %v1527 = vpack.c.b16 %v1163, %v1159
        %v1528 = vpack.c.b16 %v1164, %v1160
        %v1529 = vpack.c.b16 %v1169, %v1165
        %v1530 = vpack.c.b16 %v1170, %v1166
        %v1531 = vpack.c.b16 %v1171, %v1167
        %v1532 = vpack.c.b16 %v1172, %v1168
        %v1533 = vpack.c.b16 %v1177, %v1173
        %v1534 = vpack.c.b16 %v1178, %v1174
        %v1535 = vpack.c.b16 %v1179, %v1175
        %v1536 = vpack.c.b16 %v1180, %v1176
        %v1537 = vpack.c.b16 %v1185, %v1181
        %v1538 = vpack.c.b16 %v1186, %v1182
        %v1539 = vpack.c.b16 %v1187, %v1183
        %v1540 = vpack.c.b16 %v1188, %v1184
        %v1541 = vpack.c.b16 %v1193, %v1189
        %v1542 = vpack.c.b16 %v1194, %v1190
        %v1543 = vpack.c.b16 %v1195, %v1191
        %v1544 = vpack.c.b16 %v1196, %v1192
        %v1545 = vpack.c.b16 %v1201, %v1197
        %v1546 = vpack.c.b16 %v1202, %v1198
        %v1547 = vpack.c.b16 %v1203, %v1199
        %v1548 = vpack.c.b16 %v1204, %v1200
        %v1549 = vpack.c.b16 %v1209, %v1205
        %v1550 = vpack.c.b16 %v1210, %v1206
        %v1551 = vpack.c.b16 %v1211, %v1207
        %v1552 = vpack.c.b16 %v1212, %v1208
        %v1553 = vpack.c.b16 %v1217, %v1213
        %v1554 = vpack.c.b16 %v1218, %v1214
        %v1555 = vpack.c.b16 %v1219, %v1215
        %v1556 = vpack.c.b16 %v1220, %v1216
        %v1557 = vpack.c.b16 %v1225, %v1221
        %v1558 = vpack.c.b16 %v1226, %v1222
        %v1559 = vpack.c.b16 %v1227, %v1223
        %v1560 = vpack.c.b16 %v1228, %v1224
        %v1561 = vpack.c.b16 %v1233, %v1229
        %v1562 = vpack.c.b16 %v1234, %v1230
        %v1563 = vpack.c.b16 %v1235, %v1231
        %v1564 = vpack.c.b16 %v1236, %v1232
        %v1565 = vpack.c.b16 %v1241, %v1237
        %v1566 = vpack.c.b16 %v1242, %v1238
        %v1567 = vpack.c.b16 %v1243, %v1239
        %v1568 = vpack.c.b16 %v1244, %v1240
        %v1569 = vpack.c.b16 %v1249, %v1245
        %v1570 = vpack.c.b16 %v1250, %v1246
        %v1571 = vpack.c.b16 %v1251, %v1247
        %v1572 = vpack.c.b16 %v1252, %v1248
        %v1573 = vpack.c.b16 %v1257, %v1253
        %v1574 = vpack.c.b16 %v1258, %v1254
        %v1575 = vpack.c.b16 %v1259, %v1255
        %v1576 = vpack.c.b16 %v1260, %v1256
        %v1577 = vpack.c.b16 %v1265, %v1261
        %v1578 = vpack.c.b16 %v1266, %v1262
        %v1579 = vpack.c.b16 %v1267, %v1263
        %v1580 = vpack.c.b16 %v1268, %v1264
        %v1581 = vpack.c.b16 %v1273, %v1269
        %v1582 = vpack.c.b16 %v1274, %v1270
        %v1583 = vpack.c.b16 %v1275, %v1271
        %v1584 = vpack.c.b16 %v1276, %v1272
        %v1585 = vpack.c.b16 %v1281, %v1277
        %v1586 = vpack.c.b16 %v1282, %v1278
        %v1587 = vpack.c.b16 %v1283, %v1279
        %v1588 = vpack.c.b16 %v1284, %v1280
        %v1589 = vpack.c.b16 %v1289, %v1285
        %v1590 = vpack.c.b16 %v1290, %v1286
        %v1591 = vpack.c.b16 %v1291, %v1287
        %v1592 = vpack.c.b16 %v1292, %v1288
        %v1593 = vpack.c.b16 %v1297, %v1293
        %v1594 = vpack.c.b16 %v1298, %v1294
        %v1595 = vpack.c.b16 %v1299, %v1295
        %v1596 = vpack.c.b16 %v1300, %v1296
        %v1597 = vpack.c.b16 %v1305, %v1301
        %v1598 = vpack.c.b16 %v1306, %v1302
        %v1599 = vpack.c.b16 %v1307, %v1303
        %v1600 = vpack.c.b16 %v1308, %v1304
        %v1601 = vpack.c.b16 %v1313, %v1309
        %v1602 = vpack.c.b16 %v1314, %v1310
        %v1603 = vpack.c.b16 %v1315, %v1311
        %v1604 = vpack.c.b16 %v1316, %v1312
        %v1605 = vpack.c.b16 %v1321, %v1317
        %v1606 = vpack.c.b16 %v1322, %v1318
        %v1607 = vpack.c.b16 %v1323, %v1319
        %v1608 = vpack.c.b16 %v1324, %v1320
        %v1609 = vpack.c.b16 %v1329, %v1325
        %v1610 = vpack.c.b16 %v1330, %v1326
        %v1611 = vpack.c.b16 %v1331, %v1327
        %v1612 = vpack.c.b16 %v1332, %v1328
        %v1613 = vpack.c.b16 %v1337, %v1333
        %v1614 = vpack.c.b16 %v1338, %v1334
        %v1615 = vpack.c.b16 %v1339, %v1335
        %v1616 = vpack.c.b16 %v1340, %v1336
        %v1617 = vpack.c.b16 %v1345, %v1341
        %v1618 = vpack.c.b16 %v1346, %v1342
        %v1619 = vpack.c.b16 %v1347, %v1343
        %v1620 = vpack.c.b16 %v1348, %v1344
        %v1621 = vpack.c.b16 %v1353, %v1349
        %v1622 = vpack.c.b16 %v1354, %v1350
        %v1623 = vpack.c.b16 %v1355, %v1351
        %v1624 = vpack.c.b16 %v1356, %v1352
        %v1625 = vpack.c.b16 %v1361, %v1357
        %v1626 = vpack.c.b16 %v1362, %v1358
        %v1627 = vpack.c.b16 %v1363, %v1359
        %v1628 = vpack.c.b16 %v1364, %v1360
        %v1629 = vpack.c.b16 %v1369, %v1365
        %v1630 = vpack.c.b16 %v1370, %v1366
        %v1631 = vpack.c.b16 %v1371, %v1367
        %v1632 = vpack.c.b16 %v1372, %v1368
        %v1633 = vpack.c.b16 %v1377, %v1373
        %v1634 = vpack.c.b16 %v1378, %v1374
        %v1635 = vpack.c.b16 %v1379, %v1375
        %v1636 = vpack.c.b16 %v1380, %v1376
        %1893 = vmatprep.subr.bf16.mxu0 %v1382
        %1894 = vmatpush1.bf16.msra.mxu0 %v1381
        %1895 = vmatprep.subr.bf16.mxu0 %v1386
        %1896 = vmatpush1.bf16.msra.mxu0 %v1385
        %1897 = vmatprep.subr.bf16.mxu0 %v1390
        %1898 = vmatpush1.bf16.msra.mxu0 %v1389
        %1899 = vmatprep.subr.bf16.mxu0 %v1394
        %1900 = vmatpush1.bf16.msra.mxu0 %v1393
        %1901 = vmatprep.subr.bf16.mxu0 %v1398
        %1902 = vmatpush1.bf16.msra.mxu0 %v1397
        %1903 = vmatprep.subr.bf16.mxu0 %v1402
        %1904 = vmatpush1.bf16.msra.mxu0 %v1401
        %1905 = vmatprep.subr.bf16.mxu0 %v1406
        %1906 = vmatpush1.bf16.msra.mxu0 %v1405
        %1907 = vmatprep.subr.bf16.mxu0 %v1410
        %1908 = vmatpush1.bf16.msra.mxu0 %v1409
        %1909 = vmatprep.subr.bf16.mxu0 %v1414
        %1910 = vmatpush1.bf16.msra.mxu0 %v1413
        %1911 = vmatprep.subr.bf16.mxu0 %v1418
        %1912 = vmatpush1.bf16.msra.mxu0 %v1417
        %1913 = vmatprep.subr.bf16.mxu0 %v1422
        %1914 = vmatpush1.bf16.msra.mxu0 %v1421
        %1915 = vmatprep.subr.bf16.mxu0 %v1426
        %1916 = vmatpush1.bf16.msra.mxu0 %v1425
        %1917 = vmatprep.subr.bf16.mxu0 %v1430
        %1918 = vmatpush1.bf16.msra.mxu0 %v1429
        %1919 = vmatprep.subr.bf16.mxu0 %v1434
        %1920 = vmatpush1.bf16.msra.mxu0 %v1433
        %1921 = vmatprep.subr.bf16.mxu0 %v1438
        %1922 = vmatpush1.bf16.msra.mxu0 %v1437
        %1923 = vmatprep.subr.bf16.mxu0 %v1442
        %1924 = vmatpush1.bf16.msra.mxu0 %v1441
        %1925 = vmatprep.mubr.bf16.mxu0 %v350
        %1926 = vmatmul.mubr.bf16.gmra.mrb[0].mxu0 %v349
        %v1927 = vpop.f32.mrb[0].mxu0
        %v1928 = vadd.f32 0.0, %v1927
        %v1929 = vpop.f32.mrb[0].mxu0
        %v1930 = vadd.f32 0.0, %v1929
        %v1931 = vpop.f32.mrb[0].mxu0
        %v1932 = vadd.f32 0.0, %v1931
        %v1933 = vpop.f32.mrb[0].mxu0
        %v1934 = vadd.f32 0.0, %v1933
        %1935 = vdwg.mxu0
        %1936 = vmatprep.subr.bf16.mxu0 %v1446
        %1937 = vmatpush1.bf16.msra.mxu0 %v1445
        %1938 = vmatprep.subr.bf16.mxu0 %v1450
        %1939 = vmatpush1.bf16.msra.mxu0 %v1449
        %1940 = vmatprep.subr.bf16.mxu0 %v1454
        %1941 = vmatpush1.bf16.msra.mxu0 %v1453
        %1942 = vmatprep.subr.bf16.mxu0 %v1458
        %1943 = vmatpush1.bf16.msra.mxu0 %v1457
        %1944 = vmatprep.subr.bf16.mxu0 %v1462
        %1945 = vmatpush1.bf16.msra.mxu0 %v1461
        %1946 = vmatprep.subr.bf16.mxu0 %v1466
        %1947 = vmatpush1.bf16.msra.mxu0 %v1465
        %1948 = vmatprep.subr.bf16.mxu0 %v1470
        %1949 = vmatpush1.bf16.msra.mxu0 %v1469
        %1950 = vmatprep.subr.bf16.mxu0 %v1474
        %1951 = vmatpush1.bf16.msra.mxu0 %v1473
        %1952 = vmatprep.subr.bf16.mxu0 %v1478
        %1953 = vmatpush1.bf16.msra.mxu0 %v1477
        %1954 = vmatprep.subr.bf16.mxu0 %v1482
        %1955 = vmatpush1.bf16.msra.mxu0 %v1481
        %1956 = vmatprep.subr.bf16.mxu0 %v1486
        %1957 = vmatpush1.bf16.msra.mxu0 %v1485
        %1958 = vmatprep.subr.bf16.mxu0 %v1490
        %1959 = vmatpush1.bf16.msra.mxu0 %v1489
        %1960 = vmatprep.subr.bf16.mxu0 %v1494
        %1961 = vmatpush1.bf16.msra.mxu0 %v1493
        %1962 = vmatprep.subr.bf16.mxu0 %v1498
        %1963 = vmatpush1.bf16.msra.mxu0 %v1497
        %1964 = vmatprep.subr.bf16.mxu0 %v1502
        %1965 = vmatpush1.bf16.msra.mxu0 %v1501
        %1966 = vmatprep.subr.bf16.mxu0 %v1506
        %1967 = vmatpush1.bf16.msra.mxu0 %v1505
        %1968 = vmatprep.mubr.bf16.mxu0 %v352
        %1969 = vmatmul.mubr.bf16.gmra.mrb[0].mxu0 %v351
        %v1970 = vpop.f32.mrb[0].mxu0
        %v1971 = vadd.f32 %v1928, %v1970
        %v1972 = vpop.f32.mrb[0].mxu0
        %v1973 = vadd.f32 %v1930, %v1972
        %v1974 = vpop.f32.mrb[0].mxu0
        %v1975 = vadd.f32 %v1932, %v1974
        %v1976 = vpop.f32.mrb[0].mxu0
        %v1977 = vadd.f32 %v1934, %v1976
        %1978 = vdwg.mxu0
        %1979 = vmatprep.subr.bf16.mxu0 %v1510
        %1980 = vmatpush1.bf16.msra.mxu0 %v1509
        %1981 = vmatprep.subr.bf16.mxu0 %v1514
        %1982 = vmatpush1.bf16.msra.mxu0 %v1513
        %1983 = vmatprep.subr.bf16.mxu0 %v1518
        %1984 = vmatpush1.bf16.msra.mxu0 %v1517
        %1985 = vmatprep.subr.bf16.mxu0 %v1522
        %1986 = vmatpush1.bf16.msra.mxu0 %v1521
        %1987 = vmatprep.subr.bf16.mxu0 %v1526
        %1988 = vmatpush1.bf16.msra.mxu0 %v1525
        %1989 = vmatprep.subr.bf16.mxu0 %v1530
        %1990 = vmatpush1.bf16.msra.mxu0 %v1529
        %1991 = vmatprep.subr.bf16.mxu0 %v1534
        %1992 = vmatpush1.bf16.msra.mxu0 %v1533
        %1993 = vmatprep.subr.bf16.mxu0 %v1538
        %1994 = vmatpush1.bf16.msra.mxu0 %v1537
        %1995 = vmatprep.subr.bf16.mxu0 %v1542
        %1996 = vmatpush1.bf16.msra.mxu0 %v1541
        %1997 = vmatprep.subr.bf16.mxu0 %v1546
        %1998 = vmatpush1.bf16.msra.mxu0 %v1545
        %1999 = vmatprep.subr.bf16.mxu0 %v1550
        %2000 = vmatpush1.bf16.msra.mxu0 %v1549
        %2001 = vmatprep.subr.bf16.mxu0 %v1554
        %2002 = vmatpush1.bf16.msra.mxu0 %v1553
        %2003 = vmatprep.subr.bf16.mxu0 %v1558
        %2004 = vmatpush1.bf16.msra.mxu0 %v1557
        %2005 = vmatprep.subr.bf16.mxu0 %v1562
        %2006 = vmatpush1.bf16.msra.mxu0 %v1561
        %2007 = vmatprep.subr.bf16.mxu0 %v1566
        %2008 = vmatpush1.bf16.msra.mxu0 %v1565
        %2009 = vmatprep.subr.bf16.mxu0 %v1570
        %2010 = vmatpush1.bf16.msra.mxu0 %v1569
        %2011 = vmatprep.mubr.bf16.mxu0 %v354
        %2012 = vmatmul.mubr.bf16.gmra.mrb[0].mxu0 %v353
        %v2013 = vpop.f32.mrb[0].mxu0
        %v2014 = vadd.f32 %v1971, %v2013
        %v2015 = vpop.f32.mrb[0].mxu0
        %v2016 = vadd.f32 %v1973, %v2015
        %v2017 = vpop.f32.mrb[0].mxu0
        %v2018 = vadd.f32 %v1975, %v2017
        %v2019 = vpop.f32.mrb[0].mxu0
        %v2020 = vadd.f32 %v1977, %v2019
        %2021 = vdwg.mxu0
        %2022 = vmatprep.subr.bf16.mxu0 %v1574
        %2023 = vmatpush1.bf16.msra.mxu0 %v1573
        %2024 = vmatprep.subr.bf16.mxu0 %v1578
        %2025 = vmatpush1.bf16.msra.mxu0 %v1577
        %2026 = vmatprep.subr.bf16.mxu0 %v1582
        %2027 = vmatpush1.bf16.msra.mxu0 %v1581
        %2028 = vmatprep.subr.bf16.mxu0 %v1586
        %2029 = vmatpush1.bf16.msra.mxu0 %v1585
        %2030 = vmatprep.subr.bf16.mxu0 %v1590
        %2031 = vmatpush1.bf16.msra.mxu0 %v1589
        %2032 = vmatprep.subr.bf16.mxu0 %v1594
        %2033 = vmatpush1.bf16.msra.mxu0 %v1593
        %2034 = vmatprep.subr.bf16.mxu0 %v1598
        %2035 = vmatpush1.bf16.msra.mxu0 %v1597
        %2036 = vmatprep.subr.bf16.mxu0 %v1602
        %2037 = vmatpush1.bf16.msra.mxu0 %v1601
        %2038 = vmatprep.subr.bf16.mxu0 %v1606
        %2039 = vmatpush1.bf16.msra.mxu0 %v1605
        %2040 = vmatprep.subr.bf16.mxu0 %v1610
        %2041 = vmatpush1.bf16.msra.mxu0 %v1609
        %2042 = vmatprep.subr.bf16.mxu0 %v1614
        %2043 = vmatpush1.bf16.msra.mxu0 %v1613
        %2044 = vmatprep.subr.bf16.mxu0 %v1618
        %2045 = vmatpush1.bf16.msra.mxu0 %v1617
        %2046 = vmatprep.subr.bf16.mxu0 %v1622
        %2047 = vmatpush1.bf16.msra.mxu0 %v1621
        %2048 = vmatprep.subr.bf16.mxu0 %v1626
        %2049 = vmatpush1.bf16.msra.mxu0 %v1625
        %2050 = vmatprep.subr.bf16.mxu0 %v1630
        %2051 = vmatpush1.bf16.msra.mxu0 %v1629
        %2052 = vmatprep.subr.bf16.mxu0 %v1634
        %2053 = vmatpush1.bf16.msra.mxu0 %v1633
        %2054 = vmatprep.mubr.bf16.mxu0 %v356
        %2055 = vmatmul.mubr.bf16.gmra.mrb[0].mxu0 %v355
        %v2056 = vpop.f32.mrb[0].mxu0
        %v2057 = vadd.f32 %v2014, %v2056
        %v2058 = vpop.f32.mrb[0].mxu0
        %v2059 = vadd.f32 %v2016, %v2058
        %v2060 = vpop.f32.mrb[0].mxu0
        %v2061 = vadd.f32 %v2018, %v2060
        %v2062 = vpop.f32.mrb[0].mxu0
        %v2063 = vadd.f32 %v2020, %v2062
        %2064 = vdwg.mxu0
        %2065 = vmatprep.subr.bf16.mxu0 %v1384
        %2066 = vmatpush1.bf16.msra.mxu0 %v1383
        %2067 = vmatprep.subr.bf16.mxu0 %v1388
        %2068 = vmatpush1.bf16.msra.mxu0 %v1387
        %2069 = vmatprep.subr.bf16.mxu0 %v1392
        %2070 = vmatpush1.bf16.msra.mxu0 %v1391
        %2071 = vmatprep.subr.bf16.mxu0 %v1396
        %2072 = vmatpush1.bf16.msra.mxu0 %v1395
        %2073 = vmatprep.subr.bf16.mxu0 %v1400
        %2074 = vmatpush1.bf16.msra.mxu0 %v1399
        %2075 = vmatprep.subr.bf16.mxu0 %v1404
        %2076 = vmatpush1.bf16.msra.mxu0 %v1403
        %2077 = vmatprep.subr.bf16.mxu0 %v1408
        %2078 = vmatpush1.bf16.msra.mxu0 %v1407
        %2079 = vmatprep.subr.bf16.mxu0 %v1412
        %2080 = vmatpush1.bf16.msra.mxu0 %v1411
        %2081 = vmatprep.subr.bf16.mxu0 %v1416
        %2082 = vmatpush1.bf16.msra.mxu0 %v1415
        %2083 = vmatprep.subr.bf16.mxu0 %v1420
        %2084 = vmatpush1.bf16.msra.mxu0 %v1419
        %2085 = vmatprep.subr.bf16.mxu0 %v1424
        %2086 = vmatpush1.bf16.msra.mxu0 %v1423
        %2087 = vmatprep.subr.bf16.mxu0 %v1428
        %2088 = vmatpush1.bf16.msra.mxu0 %v1427
        %2089 = vmatprep.subr.bf16.mxu0 %v1432
        %2090 = vmatpush1.bf16.msra.mxu0 %v1431
        %2091 = vmatprep.subr.bf16.mxu0 %v1436
        %2092 = vmatpush1.bf16.msra.mxu0 %v1435
        %2093 = vmatprep.subr.bf16.mxu0 %v1440
        %2094 = vmatpush1.bf16.msra.mxu0 %v1439
        %2095 = vmatprep.subr.bf16.mxu0 %v1444
        %2096 = vmatpush1.bf16.msra.mxu0 %v1443
        %2097 = vmatprep.mubr.bf16.mxu0 %v350
        %2098 = vmatmul.mubr.bf16.gmra.mrb[0].mxu0 %v349
        %v2099 = vpop.f32.mrb[0].mxu0
        %v2100 = vadd.f32 0.0, %v2099
        %v2101 = vpop.f32.mrb[0].mxu0
        %v2102 = vadd.f32 0.0, %v2101
        %v2103 = vpop.f32.mrb[0].mxu0
        %v2104 = vadd.f32 0.0, %v2103
        %v2105 = vpop.f32.mrb[0].mxu0
        %v2106 = vadd.f32 0.0, %v2105
        %2107 = vdwg.mxu0
        %2108 = vmatprep.subr.bf16.mxu0 %v1448
        %2109 = vmatpush1.bf16.msra.mxu0 %v1447
        %2110 = vmatprep.subr.bf16.mxu0 %v1452
        %2111 = vmatpush1.bf16.msra.mxu0 %v1451
        %2112 = vmatprep.subr.bf16.mxu0 %v1456
        %2113 = vmatpush1.bf16.msra.mxu0 %v1455
        %2114 = vmatprep.subr.bf16.mxu0 %v1460
        %2115 = vmatpush1.bf16.msra.mxu0 %v1459
        %2116 = vmatprep.subr.bf16.mxu0 %v1464
        %2117 = vmatpush1.bf16.msra.mxu0 %v1463
        %2118 = vmatprep.subr.bf16.mxu0 %v1468
        %2119 = vmatpush1.bf16.msra.mxu0 %v1467
        %2120 = vmatprep.subr.bf16.mxu0 %v1472
        %2121 = vmatpush1.bf16.msra.mxu0 %v1471
        %2122 = vmatprep.subr.bf16.mxu0 %v1476
        %2123 = vmatpush1.bf16.msra.mxu0 %v1475
        %2124 = vmatprep.subr.bf16.mxu0 %v1480
        %2125 = vmatpush1.bf16.msra.mxu0 %v1479
        %2126 = vmatprep.subr.bf16.mxu0 %v1484
        %2127 = vmatpush1.bf16.msra.mxu0 %v1483
        %2128 = vmatprep.subr.bf16.mxu0 %v1488
        %2129 = vmatpush1.bf16.msra.mxu0 %v1487
        %2130 = vmatprep.subr.bf16.mxu0 %v1492
        %2131 = vmatpush1.bf16.msra.mxu0 %v1491
        %2132 = vmatprep.subr.bf16.mxu0 %v1496
        %2133 = vmatpush1.bf16.msra.mxu0 %v1495
        %2134 = vmatprep.subr.bf16.mxu0 %v1500
        %2135 = vmatpush1.bf16.msra.mxu0 %v1499
        %2136 = vmatprep.subr.bf16.mxu0 %v1504
        %2137 = vmatpush1.bf16.msra.mxu0 %v1503
        %2138 = vmatprep.subr.bf16.mxu0 %v1508
        %2139 = vmatpush1.bf16.msra.mxu0 %v1507
        %2140 = vmatprep.mubr.bf16.mxu0 %v352
        %2141 = vmatmul.mubr.bf16.gmra.mrb[0].mxu0 %v351
        %v2142 = vpop.f32.mrb[0].mxu0
        %v2143 = vadd.f32 %v2100, %v2142
        %v2144 = vpop.f32.mrb[0].mxu0
        %v2145 = vadd.f32 %v2102, %v2144
        %v2146 = vpop.f32.mrb[0].mxu0
        %v2147 = vadd.f32 %v2104, %v2146
        %v2148 = vpop.f32.mrb[0].mxu0
        %v2149 = vadd.f32 %v2106, %v2148
        %2150 = vdwg.mxu0
        %2151 = vmatprep.subr.bf16.mxu0 %v1512
        %2152 = vmatpush1.bf16.msra.mxu0 %v1511
        %2153 = vmatprep.subr.bf16.mxu0 %v1516
        %2154 = vmatpush1.bf16.msra.mxu0 %v1515
        %2155 = vmatprep.subr.bf16.mxu0 %v1520
        %2156 = vmatpush1.bf16.msra.mxu0 %v1519
        %2157 = vmatprep.subr.bf16.mxu0 %v1524
        %2158 = vmatpush1.bf16.msra.mxu0 %v1523
        %2159 = vmatprep.subr.bf16.mxu0 %v1528
        %2160 = vmatpush1.bf16.msra.mxu0 %v1527
        %2161 = vmatprep.subr.bf16.mxu0 %v1532
        %2162 = vmatpush1.bf16.msra.mxu0 %v1531
        %2163 = vmatprep.subr.bf16.mxu0 %v1536
        %2164 = vmatpush1.bf16.msra.mxu0 %v1535
        %2165 = vmatprep.subr.bf16.mxu0 %v1540
        %2166 = vmatpush1.bf16.msra.mxu0 %v1539
        %2167 = vmatprep.subr.bf16.mxu0 %v1544
        %2168 = vmatpush1.bf16.msra.mxu0 %v1543
        %2169 = vmatprep.subr.bf16.mxu0 %v1548
        %2170 = vmatpush1.bf16.msra.mxu0 %v1547
        %2171 = vmatprep.subr.bf16.mxu0 %v1552
        %2172 = vmatpush1.bf16.msra.mxu0 %v1551
        %2173 = vmatprep.subr.bf16.mxu0 %v1556
        %2174 = vmatpush1.bf16.msra.mxu0 %v1555
        %2175 = vmatprep.subr.bf16.mxu0 %v1560
        %2176 = vmatpush1.bf16.msra.mxu0 %v1559
        %2177 = vmatprep.subr.bf16.mxu0 %v1564
        %2178 = vmatpush1.bf16.msra.mxu0 %v1563
        %2179 = vmatprep.subr.bf16.mxu0 %v1568
        %2180 = vmatpush1.bf16.msra.mxu0 %v1567
        %2181 = vmatprep.subr.bf16.mxu0 %v1572
        %2182 = vmatpush1.bf16.msra.mxu0 %v1571
        %2183 = vmatprep.mubr.bf16.mxu0 %v354
        %2184 = vmatmul.mubr.bf16.gmra.mrb[0].mxu0 %v353
        %v2185 = vpop.f32.mrb[0].mxu0
        %v2186 = vadd.f32 %v2143, %v2185
        %v2187 = vpop.f32.mrb[0].mxu0
        %v2188 = vadd.f32 %v2145, %v2187
        %v2189 = vpop.f32.mrb[0].mxu0
        %v2190 = vadd.f32 %v2147, %v2189
        %v2191 = vpop.f32.mrb[0].mxu0
        %v2192 = vadd.f32 %v2149, %v2191
        %2193 = vdwg.mxu0
        %2194 = vmatprep.subr.bf16.mxu0 %v1576
        %2195 = vmatpush1.bf16.msra.mxu0 %v1575
        %2196 = vmatprep.subr.bf16.mxu0 %v1580
        %2197 = vmatpush1.bf16.msra.mxu0 %v1579
        %2198 = vmatprep.subr.bf16.mxu0 %v1584
        %2199 = vmatpush1.bf16.msra.mxu0 %v1583
        %2200 = vmatprep.subr.bf16.mxu0 %v1588
        %2201 = vmatpush1.bf16.msra.mxu0 %v1587
        %2202 = vmatprep.subr.bf16.mxu0 %v1592
        %2203 = vmatpush1.bf16.msra.mxu0 %v1591
        %2204 = vmatprep.subr.bf16.mxu0 %v1596
        %2205 = vmatpush1.bf16.msra.mxu0 %v1595
        %2206 = vmatprep.subr.bf16.mxu0 %v1600
        %2207 = vmatpush1.bf16.msra.mxu0 %v1599
        %2208 = vmatprep.subr.bf16.mxu0 %v1604
        %2209 = vmatpush1.bf16.msra.mxu0 %v1603
        %2210 = vmatprep.subr.bf16.mxu0 %v1608
        %2211 = vmatpush1.bf16.msra.mxu0 %v1607
        %2212 = vmatprep.subr.bf16.mxu0 %v1612
        %2213 = vmatpush1.bf16.msra.mxu0 %v1611
        %2214 = vmatprep.subr.bf16.mxu0 %v1616
        %2215 = vmatpush1.bf16.msra.mxu0 %v1615
        %2216 = vmatprep.subr.bf16.mxu0 %v1620
        %2217 = vmatpush1.bf16.msra.mxu0 %v1619
        %2218 = vmatprep.subr.bf16.mxu0 %v1624
        %2219 = vmatpush1.bf16.msra.mxu0 %v1623
        %2220 = vmatprep.subr.bf16.mxu0 %v1628
        %2221 = vmatpush1.bf16.msra.mxu0 %v1627
        %2222 = vmatprep.subr.bf16.mxu0 %v1632
        %2223 = vmatpush1.bf16.msra.mxu0 %v1631
        %2224 = vmatprep.subr.bf16.mxu0 %v1636
        %2225 = vmatpush1.bf16.msra.mxu0 %v1635
        %2226 = vmatprep.mubr.bf16.mxu0 %v356
        %2227 = vmatmul.mubr.bf16.gmra.mrb[0].mxu0 %v355
        %v2228 = vpop.f32.mrb[0].mxu0
        %v2229 = vadd.f32 %v2186, %v2228
        %v2230 = vpop.f32.mrb[0].mxu0
        %v2231 = vadd.f32 %v2188, %v2230
        %v2232 = vpop.f32.mrb[0].mxu0
        %v2233 = vadd.f32 %v2190, %v2232
        %v2234 = vpop.f32.mrb[0].mxu0
        %v2235 = vadd.f32 %v2192, %v2234
        %2236 = vdwg.mxu0
        %v2237 = vadd.f32 %v325, %v2057
        %v2238 = vadd.f32 %v326, %v2059
        %v2239 = vadd.f32 %v327, %v2229
        %v2240 = vadd.f32 %v328, %v2231
        %v2241 = vadd.f32 %v329, %v2061
        %v2242 = vadd.f32 %v330, %v2063
        %v2243 = vadd.f32 %v331, %v2233
        %v2244 = vadd.f32 %v332, %v2235
        %2245 = vst [vmem:[%s305] sm:$0xff] %v2237
        %2246 = vst [vmem:[%s305 + $0x8] sm:$0xff] %v2238
        %2247 = vst [vmem:[%s305 + $0x10] sm:$0xff] %v2239
        %2248 = vst [vmem:[%s305 + $0x18] sm:$0xff] %v2240
        %2249 = vst [vmem:[%s305 + $0x20] sm:$0xff] %v2241
        %2250 = vst [vmem:[%s305 + $0x28] sm:$0xff] %v2242
        %2251 = vst [vmem:[%s305 + $0x30] sm:$0xff] %v2243
        %2252 = vst [vmem:[%s305 + $0x38] sm:$0xff] %v2244
        // Predicated region
        $region53: #{tpu_custom_call.1} parent=35 // pred_check
          %p2253 = pneg %p313
        $region54: #{tpu_custom_call.1} parent=35 // pred_check_branch
          %2255 = sbr.rel (%p2253) target = $region56
        $region55: #{tpu_custom_call.1} parent=35 // pred_region
          %s2256 = sld [smem:[#allocation2]]
          %s2257 = ssub.f32 0.0, %s2256
          %v2258 = vld [vmem:[%s305] sm:$0xff]
          %v2259 = vld [vmem:[%s305 + $0x8] sm:$0xff]
          %v2260 = vld [vmem:[%s305 + $0x10] sm:$0xff]
          %v2261 = vld [vmem:[%s305 + $0x18] sm:$0xff]
          %v2262 = vld [vmem:[%s305 + $0x20] sm:$0xff]
          %v2263 = vld [vmem:[%s305 + $0x28] sm:$0xff]
          %v2264 = vld [vmem:[%s305 + $0x30] sm:$0xff]
          %v2265 = vld [vmem:[%s305 + $0x38] sm:$0xff]
          %v2266 = vld [vmem:[%s276] sm:$0xf]
          %v2267 = vstv %s2257
          %v2268 = vmul.f32 %v2267, %v2266
          %v2270 = vlaneseq
          %v2271 = vshrl.u32 %v2270, 7
          %v2272 = vsub.s32 0, %v2271
          %v2273 = vrot.slane %v2268, %v2272
          %v2274 = vlaneseq
          %v2275 = vshrl.u32 %v2274, 7
          %v2276 = vsub.s32 1, %v2275
          %v2277 = vrot.slane %v2268, %v2276
          %v2278 = vlaneseq
          %v2279 = vshrl.u32 %v2278, 7
          %v2280 = vsub.s32 2, %v2279
          %v2281 = vrot.slane %v2268, %v2280
          %v2282 = vlaneseq
          %v2283 = vshrl.u32 %v2282, 7
          %v2284 = vsub.s32 3, %v2283
          %v2285 = vrot.slane %v2268, %v2284
          %v2290 = vadd.f32 %v2258, %v2273
          %v2291 = vadd.f32 %v2259, %v2277
          %v2292 = vadd.f32 %v2260, %v2281
          %v2293 = vadd.f32 %v2261, %v2285
          %v2294 = vadd.f32 %v2262, %v2273
          %v2295 = vadd.f32 %v2263, %v2277
          %v2296 = vadd.f32 %v2264, %v2281
          %v2297 = vadd.f32 %v2265, %v2285
          %v2298 = vtanh.pop %v2290
          %v2299 = vtanh.pop %v2291
          %v2300 = vtanh.pop %v2292
          %v2301 = vtanh.pop %v2293
          %v2302 = vtanh.pop %v2294
          %v2303 = vtanh.pop %v2295
          %v2304 = vtanh.pop %v2296
          %v2305 = vtanh.pop %v2297
          %v2306 = vmul.f32 %v2298, -1.0
          %v2307 = vmul.f32 %v2299, -1.0
          %v2308 = vmul.f32 %v2300, -1.0
          %v2309 = vmul.f32 %v2301, -1.0
          %v2310 = vmul.f32 %v2302, -1.0
          %v2311 = vmul.f32 %v2303, -1.0
          %v2312 = vmul.f32 %v2304, -1.0
          %v2313 = vmul.f32 %v2305, -1.0
          %2314 = vst [vmem:[%s305] sm:$0xff] %v2306
          %2315 = vst [vmem:[%s305 + $0x8] sm:$0xff] %v2307
          %2316 = vst [vmem:[%s305 + $0x10] sm:$0xff] %v2308
          %2317 = vst [vmem:[%s305 + $0x18] sm:$0xff] %v2309
          %2318 = vst [vmem:[%s305 + $0x20] sm:$0xff] %v2310
          %2319 = vst [vmem:[%s305 + $0x28] sm:$0xff] %v2311
          %2320 = vst [vmem:[%s305 + $0x30] sm:$0xff] %v2312
          %2321 = vst [vmem:[%s305 + $0x38] sm:$0xff] %v2313
        $region56: #{tpu_custom_call.1} parent=35 // pred_fallthru
          _
        %s2322 = sand.u32 %s155, 1
        %s2323 = scalar_lea.sflag [#allocation5], %s2322
        %s2324 = sand.u32 %s155, 1
        %s2325 = smul.addr %s2324, 64
        %s2326 = scalar_lea.vmem [#allocation9], %s2325
        // Predicated region
        $region57: #{tpu_custom_call.1} parent=35 // pred_check
          %p2327 = pneg %p165
        $region58: #{tpu_custom_call.1} parent=35 // pred_check_branch
          %2329 = sbr.rel (%p2327) target = $region60
        $region59: #{tpu_custom_call.1} parent=35 // pred_region
          %s2330 = smul.u32 2, %s28
          %s2331 = smul.u32 4, %s29
          %s2333 = ssub.s32 1024, 1024
          %2334 = vsyncadd %s2323, %s2333
          %s2335 = smul.addr %s2330, 8
          %s2336 = sadd.s32 %s2331, %s2335
          %s2337 = smul.addr %s2336, 128
          %s2338 = scalar_lea.hbm %s4, %s2337
          %s2339 = sshll.u32 %s2326, 4
          %s2340 = int_to_ptr.vmem [resolvable:$true] %s2339
          %2345 = dma.vmem_to_hbm [thread:$0]  %s2340, 1024, %s2338, %s2323, 512, 1024, 32
        $region60: #{tpu_custom_call.1} parent=35 // pred_fallthru
          _
      $region36: #{tpu_custom_call.1} parent=5 // pred_fallthru
        _
      %p2346 = scmp.le.s32.totalorder 2, %s18
      // Predicated region
      $region61: #{tpu_custom_call.1} parent=5 // pred_check
        %p2347 = pneg %p2346
      $region62: #{tpu_custom_call.1} parent=5 // pred_check_branch
        %2349 = sbr.rel (%p2347) target = $region64
      $region63: #{tpu_custom_call.1} parent=5 // pred_region
        %s2350 = ssub.s32 %s18, 2
        // Predicated region
        $region65: #{tpu_custom_call.1} parent=63 // pred_check
          %p2351 = pneg %p171
        $region66: #{tpu_custom_call.1} parent=63 // pred_check_branch
          %2353 = sbr.rel (%p2351) target = $region68
        $region67: #{tpu_custom_call.1} parent=63 // pred_region
          %s2354 = sand.u32 %s156, 1
          %s2355 = scalar_lea.sflag [#allocation5], %s2354
          %s2356 = sand.u32 %s156, 1
          %s2357 = smul.addr %s2356, 64
          %s2358 = scalar_lea.vmem [#allocation9], %s2357
          %2359 = dma.done %s2355, 1024
        $region68: #{tpu_custom_call.1} parent=63 // pred_fallthru
          _
      $region64: #{tpu_custom_call.1} parent=5 // pred_fallthru
        _
    $region6: #{tpu_custom_call.1} parent=1 // loop_footer
      %s22 = sadd.s32 1, %s18
    $region7: #{tpu_custom_call.1} parent=1 // loop_footer_branch
      %17 = sbr.rel target = $region3
    $region8: #{tpu_custom_call.1} parent=1 // loop_exit
      _
    %2360 = vsyncpa [#allocation4], 1
    %s2361 = scalar_lea.sflag [#allocation4], 1
    %2362 = vsyncpa %s2361, 1
    %2363 = vsyncpa [#allocation7], 1
    %s2364 = scalar_lea.sflag [#allocation7], 1
    %2365 = vsyncpa %s2364, 1
    %2366 = vsyncpa [#allocation5], 1
    %s2367 = scalar_lea.sflag [#allocation5], 1
    %2368 = vsyncpa %s2367, 1

</llo_original>
